<compile_context>
chip_gen: v7x
topology: tpu7x:2x2x1
jax: 0.10.0
libtpu: 0.0.40
codegen_flags: <defaults>
</compile_context>

<pallas_src>
import math
import functools

import jax
import jax.numpy as jnp
from jax.experimental import pallas as pl
from jax.experimental.pallas import tpu as pltpu


# ----------------------------------------------------------------------------
# Relative position bias (glue, plain JAX — matches torch semantics exactly)
# ----------------------------------------------------------------------------
def _relative_position_bucket(relative_position, bidirectional=True,
                              num_buckets=32, max_distance=128):
    relative_buckets = jnp.zeros_like(relative_position)
    if bidirectional:
        num_buckets //= 2
        relative_buckets = relative_buckets + (
            relative_position > 0).astype(jnp.int32) * num_buckets
        relative_position = jnp.abs(relative_position)
    else:
        relative_position = -jnp.minimum(relative_position,
                                         jnp.zeros_like(relative_position))
    max_exact = num_buckets // 2
    is_small = relative_position < max_exact
    # Clamp to >=1 inside the log so the (unselected) diagonal never produces
    # log(0) -> -inf -> backend-defined int cast.
    rp_safe = jnp.maximum(relative_position, 1)
    rp_if_large = max_exact + (
        jnp.log(rp_safe.astype(jnp.float32) / max_exact)
        / math.log(max_distance / max_exact)
        * (num_buckets - max_exact)
    ).astype(jnp.int32)
    rp_if_large = jnp.minimum(rp_if_large,
                              jnp.full_like(rp_if_large, num_buckets - 1))
    relative_buckets = relative_buckets + jnp.where(is_small, relative_position,
                                                    rp_if_large)
    return relative_buckets


def compute_bias(rel_emb, query_length, key_length, *, bidirectional,
                 num_buckets, max_distance):
    """rel_emb: [num_buckets, n_heads]  -> bias [1, n_heads, q_len, k_len]."""
    context_position = jnp.arange(query_length, dtype=jnp.int32)[:, None]
    memory_position = jnp.arange(key_length, dtype=jnp.int32)[None, :]
    relative_position = memory_position - context_position
    rp_bucket = _relative_position_bucket(
        relative_position, bidirectional=bidirectional,
        num_buckets=num_buckets, max_distance=max_distance)
    values = jnp.take(rel_emb, rp_bucket, axis=0)          # [q, k, n_heads]
    values = jnp.transpose(values, (2, 0, 1))[None, ...]   # [1, n_heads, q, k]
    return values


# ----------------------------------------------------------------------------
# Attention-core Pallas kernel: head-batched, flash-style online softmax
# grid = (B, num_q_tiles, num_kv_tiles); kv axis is the reduction ("arbitrary")
# ----------------------------------------------------------------------------
def _attn_core_kernel(q_ref, kT_ref, v_ref, bias_ref, *rest,
                      n_heads, d_head, has_mask):
    if has_mask:
        mask_ref, o_ref, m_sc, l_sc, acc_sc = rest
    else:
        o_ref, m_sc, l_sc, acc_sc = rest

    kv_idx = pl.program_id(2)

    @pl.when(kv_idx == 0)
    def _():
        m_sc[...] = jnp.full(m_sc.shape, -jnp.inf, dtype=jnp.float32)
        l_sc[...] = jnp.zeros(l_sc.shape, dtype=jnp.float32)
        acc_sc[...] = jnp.zeros(acc_sc.shape, dtype=jnp.float32)

    q = q_ref[0]          # (H, TQ, dh)   already scaled by 1/sqrt(dh) via w_qs
    kT = kT_ref[0]        # (H, dh, TK)   K pre-transposed -> TK on lanes
    v = v_ref[0]          # (H, TK, dh)

    # Head-batched score matmul, canonical (TQ,dh)x(dh,TK) per head on the MXU.
    s = jnp.einsum('hqd,hdk->hqk', q, kT,
                   preferred_element_type=jnp.float32)      # (H, TQ, TK) f32
    s = s + bias_ref[...].astype(jnp.float32)

    if has_mask:
        # Additive key mask (0 / -1e9), shape (1, 1, TK): one broadcast add.
        s = s + mask_ref[...]

    # Online softmax update
    m_prev = m_sc[...]                                       # (H, TQ, 1)
    m_new = jnp.maximum(m_prev, jnp.max(s, axis=-1, keepdims=True))
    alpha = jnp.exp(m_prev - m_new)
    p = jnp.exp(s - m_new)
    l_sc[...] = alpha * l_sc[...] + jnp.sum(p, axis=-1, keepdims=True)
    acc_sc[...] = alpha * acc_sc[...] + jnp.einsum(
        'hqk,hkd->hqd', p.astype(v.dtype), v,
        preferred_element_type=jnp.float32)
    m_sc[...] = m_new

    @pl.when(kv_idx == pl.num_programs(2) - 1)
    def _():
        inv_l = pl.reciprocal(l_sc[...], approx=True)        # EUP slot
        out = acc_sc[...] * inv_l                            # (H, TQ, dh) f32
        # Emit merged-head output (TQ, H*dh) so the HBM writeback is one
        # lane-dense (1, TQ, D) block instead of a d_head-wide per-head slab.
        for h in range(n_heads):
            o_ref[0, :, h * d_head:(h + 1) * d_head] = out[h].astype(o_ref.dtype)


# ----------------------------------------------------------------------------
# Tiling helpers (with pad-and-mask fallback instead of whole-axis tiles)
# ----------------------------------------------------------------------------
def _round_up(x, m):
    return ((x + m - 1) // m) * m


def _pick_tile(n, target, align):
    """Return (tile, padded_n) with tile <= max(target, round_up(n, align))."""
    if n <= target:
        t = _round_up(n, align)
        return t, t
    t = (target // align) * align
    while t >= align:
        if n % t == 0:
            return t, n
        t -= align
    t = (target // align) * align
    return t, _round_up(n, t)


# ----------------------------------------------------------------------------
# Wrapper
# ----------------------------------------------------------------------------
def multihead_relative_attention(query, key, value, params, *, n_heads,
                                 bidirectional=True, num_buckets=32,
                                 max_distance=128, position_bias=None,
                                 mask=None):
    """Returns (output [B, S_q, D], position_bias [1, H, S_q, S_kv])."""
    B, S_q, D = query.shape
    S_kv = key.shape[1]
    assert D % n_heads == 0
    d_head = D // n_heads
    in_dtype = query.dtype

    if position_bias is None:
        position_bias = compute_bias(
            params["rel_emb"], S_q, S_kv, bidirectional=bidirectional,
            num_buckets=num_buckets, max_distance=max_distance)

    # ---- weight preprocessing: pre-transpose to (in, out), fold 1/sqrt(dh)
    scale = 1.0 / math.sqrt(d_head)
    wq_t = (jnp.transpose(params["w_qs"]) * scale).astype(in_dtype)
    wk_t = jnp.transpose(params["w_ks"]).astype(in_dtype)
    wv_t = jnp.transpose(params["w_vs"]).astype(in_dtype)
    wfc_t = jnp.transpose(params["fc"]).astype(in_dtype)

    # ---- tiling (bf16 packs 16 rows/sublane -> align TQ to 16 for bf16)
    align_q = 16 if in_dtype == jnp.bfloat16 else 8
    TQ, S_q_p = _pick_tile(S_q, 256, align_q)
    TK, S_kv_p = _pick_tile(S_kv, 256, 128 if S_kv > 256 else align_q)
    pad_q = S_q_p - S_q
    pad_k = S_kv_p - S_kv

    # ---- QKV projections as XLA GEMMs, split into heads
    qp = (query @ wq_t).reshape(B, S_q, n_heads, d_head)
    kp = (key @ wk_t).reshape(B, S_kv, n_heads, d_head)
    vp = (value @ wv_t).reshape(B, S_kv, n_heads, d_head)
    qp = jnp.transpose(qp, (0, 2, 1, 3))        # (B, H, S_q,  dh)
    kp = jnp.transpose(kp, (0, 2, 3, 1))        # (B, H, dh, S_kv)  lanes = S_kv
    vp = jnp.transpose(vp, (0, 2, 1, 3))        # (B, H, S_kv, dh)

    if pad_q:
        qp = jnp.pad(qp, ((0, 0), (0, 0), (0, pad_q), (0, 0)))
    if pad_k:
        kp = jnp.pad(kp, ((0, 0), (0, 0), (0, 0), (0, pad_k)))
        vp = jnp.pad(vp, ((0, 0), (0, 0), (0, pad_k), (0, 0)))

    # Bias for the kernel at compute dtype; returned bias stays full precision.
    bias_k = position_bias[0].astype(in_dtype)               # (H, S_q, S_kv)
    if pad_q or pad_k:
        bias_k = jnp.pad(bias_k, ((0, 0), (0, pad_q), (0, pad_k)))

    # ---- additive key mask (tiny (B, 1, S_kv_p) f32) when a user mask is
    #      given and/or kv padding needs to be excluded from the softmax.
    need_mask = (mask is not None) or (pad_k > 0)
    mask_bias = None
    if need_mask:
        if mask is not None:
            if mask.ndim != 2:
                # TODO(synk): 3D / per-head 4D masks are not plumbed into the
                # kernel (only the common (B, S_kv) key-padding mask is).
                raise NotImplementedError("only 2D (batch, key) masks supported")
            keep = mask.astype(bool)
        else:
            keep = jnp.ones((B, S_kv), dtype=bool)
        if pad_k:
            keep = jnp.pad(keep, ((0, 0), (0, pad_k)), constant_values=False)
        mask_bias = jnp.where(keep, 0.0, -1e9).astype(jnp.float32)[:, None, :]

    # ---- grid / specs
    grid = (B, S_q_p // TQ, S_kv_p // TK)

    in_specs = [
        pl.BlockSpec((1, n_heads, TQ, d_head), lambda b, qi, ki: (b, 0, qi, 0)),
        pl.BlockSpec((1, n_heads, d_head, TK), lambda b, qi, ki: (b, 0, 0, ki)),
        pl.BlockSpec((1, n_heads, TK, d_head), lambda b, qi, ki: (b, 0, ki, 0)),
        pl.BlockSpec((n_heads, TQ, TK), lambda b, qi, ki: (0, qi, ki)),
    ]
    inputs = [qp, kp, vp, bias_k]
    if need_mask:
        in_specs.append(pl.BlockSpec((1, 1, TK), lambda b, qi, ki: (b, 0, ki)))
        inputs.append(mask_bias)

    ctx = pl.pallas_call(
        functools.partial(_attn_core_kernel, n_heads=n_heads, d_head=d_head,
                          has_mask=need_mask),
        out_shape=jax.ShapeDtypeStruct((B, S_q_p, D), in_dtype),
        grid_spec=pltpu.PrefetchScalarGridSpec(
            num_scalar_prefetch=0,
            grid=grid,
            in_specs=in_specs,
            out_specs=pl.BlockSpec((1, TQ, D), lambda b, qi, ki: (b, qi, 0)),
            scratch_shapes=[
                pltpu.VMEM((n_heads, TQ, 1), jnp.float32),       # running max
                pltpu.VMEM((n_heads, TQ, 1), jnp.float32),       # running sum
                pltpu.VMEM((n_heads, TQ, d_head), jnp.float32),  # accumulator
            ]),
        compiler_params=pltpu.CompilerParams(
            dimension_semantics=("parallel", "parallel", "arbitrary"),
            vmem_limit_bytes=32 * 1024 * 1024),
    )(*inputs)

    # ---- output projection (XLA GEMM) on the already-merged-head context
    if pad_q:
        ctx = ctx[:, :S_q, :]
    out = (ctx @ wfc_t).astype(in_dtype)

    return out, position_bias


# ----------------------------------------------------------------------------
# Pure-JAX reference (correctness sanity check)
# ----------------------------------------------------------------------------
def reference_forward(query, key, value, params, *, n_heads,
                      bidirectional=True, num_buckets=32, max_distance=128,
                      mask=None):
    B, S_q, D = query.shape
    S_kv = key.shape[1]
    d_head = D // n_heads
    q = (query @ params["w_qs"].T).reshape(B, S_q, n_heads, d_head).transpose(0, 2, 1, 3)
    k = (key @ params["w_ks"].T).reshape(B, S_kv, n_heads, d_head).transpose(0, 2, 1, 3)
    v = (value @ params["w_vs"].T).reshape(B, S_kv, n_heads, d_head).transpose(0, 2, 1, 3)
    scores = jnp.einsum("bhqd,bhkd->bhqk", q, k) / math.sqrt(d_head)
    bias = compute_bias(params["rel_emb"], S_q, S_kv, bidirectional=bidirectional,
                        num_buckets=num_buckets, max_distance=max_distance)
    scores = scores + bias
    if mask is not None:
        scores = jnp.where(mask[:, None, None, :] == 0, -1e9, scores)
    attn = jax.nn.softmax(scores, axis=-1)
    out = jnp.einsum("bhqk,bhkd->bhqd", attn, v)
    out = out.transpose(0, 2, 1, 3).reshape(B, S_q, D)
    return out @ params["fc"].T, bias


# ----------------------------------------------------------------------------
if __name__ == "__main__":
    B, S, D = 2, 8, 32
    N_HEADS = 4
    NUM_BUCKETS = 32
    MAX_DISTANCE = 128

    key0 = jax.random.PRNGKey(0)
    kq, kk, kv, kwq, kwk, kwv, kfc, kemb = jax.random.split(key0, 8)

    query = jax.random.normal(kq, (B, S, D), dtype=jnp.float32)
    key_in = jax.random.normal(kk, (B, S, D), dtype=jnp.float32)
    value = jax.random.normal(kv, (B, S, D), dtype=jnp.float32)

    # nn.Linear weights are [out, in]; no biases.  nn.Embedding(num_buckets, H).
    params = {
        "w_qs": 0.05 * jax.random.normal(kwq, (D, D), dtype=jnp.float32),
        "w_ks": 0.05 * jax.random.normal(kwk, (D, D), dtype=jnp.float32),
        "w_vs": 0.05 * jax.random.normal(kwv, (D, D), dtype=jnp.float32),
        "fc":   0.05 * jax.random.normal(kfc, (D, D), dtype=jnp.float32),
        "rel_emb": 0.05 * jax.random.normal(kemb, (NUM_BUCKETS, N_HEADS),
                                            dtype=jnp.float32),
    }

    # ---- test 1: no mask (dropout=0.0 is an Identity in the reference module)
    out, pos_bias = multihead_relative_attention(
        query, key_in, value, params, n_heads=N_HEADS,
        bidirectional=True, num_buckets=NUM_BUCKETS, max_distance=MAX_DISTANCE)
    out = jax.block_until_ready(out)
    pos_bias = jax.block_until_ready(pos_bias)

    ref_out, ref_bias = reference_forward(
        query, key_in, value, params, n_heads=N_HEADS,
        bidirectional=True, num_buckets=NUM_BUCKETS, max_distance=MAX_DISTANCE)

    assert out.shape == (B, S, D)
    assert out.dtype == query.dtype
    assert pos_bias.shape == (1, N_HEADS, S, S)
    assert jnp.allclose(out, ref_out, atol=1e-3, rtol=1e-3)
    assert jnp.allclose(pos_bias, ref_bias, atol=1e-6, rtol=1e-6)

    # ---- test 2: 2D key mask + pad-and-mask path (S not tile-aligned)
    S2 = 12
    kq2, kk2, kv2 = jax.random.split(jax.random.PRNGKey(1), 3)
    query2 = jax.random.normal(kq2, (B, S2, D), dtype=jnp.float32)
    key2 = jax.random.normal(kk2, (B, S2, D), dtype=jnp.float32)
    value2 = jax.random.normal(kv2, (B, S2, D), dtype=jnp.float32)
    mask2 = jnp.ones((B, S2), dtype=jnp.int32).at[:, -3:].set(0)

    out2, _ = multihead_relative_attention(
        query2, key2, value2, params, n_heads=N_HEADS,
        bidirectional=True, num_buckets=NUM_BUCKETS, max_distance=MAX_DISTANCE,
        mask=mask2)
    out2 = jax.block_until_ready(out2)
    ref_out2, _ = reference_forward(
        query2, key2, value2, params, n_heads=N_HEADS,
        bidirectional=True, num_buckets=NUM_BUCKETS, max_distance=MAX_DISTANCE,
        mask=mask2)
    assert out2.shape == (B, S2, D)
    assert jnp.allclose(out2, ref_out2, atol=1e-3, rtol=1e-3)

    print("KERNEL_OK")
</pallas_src>

<mosaic_0001>
module attributes {stable_mosaic.version = 11 : i64} {
  func.func @_attn_core_kernel(%arg0: i32, %arg1: i32, %arg2: i32, %arg3: memref<1x4x8x8xf32, #tpu.memory_space<vmem>>, %arg4: memref<1x4x8x8xf32, #tpu.memory_space<vmem>>, %arg5: memref<1x4x8x8xf32, #tpu.memory_space<vmem>>, %arg6: memref<4x8x8xf32, #tpu.memory_space<vmem>>, %arg7: memref<1x8x32xf32, #tpu.memory_space<vmem>>, %arg8: memref<4x8x1xf32, #tpu.memory_space<vmem>>, %arg9: memref<4x8x1xf32, #tpu.memory_space<vmem>>, %arg10: memref<4x8x8xf32, #tpu.memory_space<vmem>>) attributes {dimension_semantics = [#tpu.dimension_semantics<parallel>, #tpu.dimension_semantics<parallel>, #tpu.dimension_semantics<arbitrary>], iteration_bounds = array<i64: 2, 1, 1>, scalar_prefetch = 0 : i64, scratch_operands = 3 : i64, tpu.core_type = #tpu.core_type<tc>, window_params = [{transform_indices = @transform_0, window_bounds = array<i64: 1, 4, 8, 8>}, {transform_indices = @transform_1, window_bounds = array<i64: 1, 4, 8, 8>}, {transform_indices = @transform_2, window_bounds = array<i64: 1, 4, 8, 8>}, {transform_indices = @transform_3, window_bounds = array<i64: 4, 8, 8>}, {transform_indices = @transform_4, window_bounds = array<i64: 1, 8, 32>}]} {
    %c0_i32 = arith.constant 0 : i32
    %0 = arith.cmpi eq, %arg2, %c0_i32 : i32
    %1 = arith.extui %0 : i1 to i32
    %c0_i32_0 = arith.constant 0 : i32
    %2 = arith.cmpi ne, %1, %c0_i32_0 : i32
    scf.if %2 {
      %cst_38 = arith.constant 0xFF800000 : f32
      %37 = vector.broadcast %cst_38 : f32 to vector<4x8x1xf32>
      %c0_39 = arith.constant 0 : index
      %c0_40 = arith.constant 0 : index
      %c0_41 = arith.constant 0 : index
      %38 = vector.load %arg8[%c0_39, %c0_40, %c0_41] : memref<4x8x1xf32, #tpu.memory_space<vmem>>, vector<4x8x1xf32>
      tpu.vector_store %arg8[%c0_39, %c0_40, %c0_41], %37 {strides = array<i32>} : memref<4x8x1xf32, #tpu.memory_space<vmem>>, vector<4x8x1xf32>,
      %cst_42 = arith.constant 0.000000e+00 : f32
      %39 = vector.broadcast %cst_42 : f32 to vector<4x8x1xf32>
      %c0_43 = arith.constant 0 : index
      %c0_44 = arith.constant 0 : index
      %c0_45 = arith.constant 0 : index
      %40 = vector.load %arg9[%c0_43, %c0_44, %c0_45] : memref<4x8x1xf32, #tpu.memory_space<vmem>>, vector<4x8x1xf32>
      tpu.vector_store %arg9[%c0_43, %c0_44, %c0_45], %39 {strides = array<i32>} : memref<4x8x1xf32, #tpu.memory_space<vmem>>, vector<4x8x1xf32>,
      %cst_46 = arith.constant 0.000000e+00 : f32
      %41 = vector.broadcast %cst_46 : f32 to vector<4x8x8xf32>
      %c0_47 = arith.constant 0 : index
      %c0_48 = arith.constant 0 : index
      %c0_49 = arith.constant 0 : index
      %42 = vector.load %arg10[%c0_47, %c0_48, %c0_49] : memref<4x8x8xf32, #tpu.memory_space<vmem>>, vector<4x8x8xf32>
      tpu.vector_store %arg10[%c0_47, %c0_48, %c0_49], %41 {strides = array<i32>} : memref<4x8x8xf32, #tpu.memory_space<vmem>>, vector<4x8x8xf32>,
    } else {
    }
    %c0 = arith.constant 0 : index
    %c0_1 = arith.constant 0 : index
    %c0_2 = arith.constant 0 : index
    %c0_3 = arith.constant 0 : index
    %3 = vector.load %arg3[%c0, %c0_1, %c0_2, %c0_3] : memref<1x4x8x8xf32, #tpu.memory_space<vmem>>, vector<1x4x8x8xf32>
    %4 = vector.shape_cast %3 : vector<1x4x8x8xf32> to vector<4x8x8xf32>
    %c0_4 = arith.constant 0 : index
    %c0_5 = arith.constant 0 : index
    %c0_6 = arith.constant 0 : index
    %c0_7 = arith.constant 0 : index
    %5 = vector.load %arg4[%c0_4, %c0_5, %c0_6, %c0_7] : memref<1x4x8x8xf32, #tpu.memory_space<vmem>>, vector<1x4x8x8xf32>
    %6 = vector.shape_cast %5 : vector<1x4x8x8xf32> to vector<4x8x8xf32>
    %c0_8 = arith.constant 0 : index
    %c0_9 = arith.constant 0 : index
    %c0_10 = arith.constant 0 : index
    %c0_11 = arith.constant 0 : index
    %7 = vector.load %arg5[%c0_8, %c0_9, %c0_10, %c0_11] : memref<1x4x8x8xf32, #tpu.memory_space<vmem>>, vector<1x4x8x8xf32>
    %8 = vector.shape_cast %7 : vector<1x4x8x8xf32> to vector<4x8x8xf32>
    "tpu.trace_start"() <{level = 10 : i32, message = "hqd,hdk->hqk"}> : () -> ()
    %cst = arith.constant dense<0.000000e+00> : vector<4x8x8xf32>
    %9 = tpu.matmul %4, %6, %cst {dimension_numbers = #tpu.dot_dimension_numbers<[2], [1], [1], [2], [0, 0, 0, 1, 1, 2], [0], [0]>} : vector<4x8x8xf32>, vector<4x8x8xf32>, vector<4x8x8xf32> -> vector<4x8x8xf32>
    "tpu.trace_stop"() : () -> ()
    %c0_12 = arith.constant 0 : index
    %c0_13 = arith.constant 0 : index
    %c0_14 = arith.constant 0 : index
    %10 = vector.load %arg6[%c0_12, %c0_13, %c0_14] : memref<4x8x8xf32, #tpu.memory_space<vmem>>, vector<4x8x8xf32>
    %11 = arith.addf %9, %10 : vector<4x8x8xf32>
    %c0_15 = arith.constant 0 : index
    %c0_16 = arith.constant 0 : index
    %c0_17 = arith.constant 0 : index
    %12 = vector.load %arg8[%c0_15, %c0_16, %c0_17] : memref<4x8x1xf32, #tpu.memory_space<vmem>>, vector<4x8x1xf32>
    %cst_18 = arith.constant dense<0xFF800000> : vector<4x8xf32>
    %13 = vector.multi_reduction <maximumf>, %11, %cst_18 [2] : vector<4x8x8xf32> to vector<4x8xf32>
    %14 = vector.shape_cast %13 : vector<4x8xf32> to vector<4x8x1xf32>
    %15 = arith.maximumf %12, %14 : vector<4x8x1xf32>
    %16 = arith.subf %12, %15 : vector<4x8x1xf32>
    %17 = math.exp %16 : vector<4x8x1xf32>
    %18 = vector.broadcast %15 : vector<4x8x1xf32> to vector<4x8x8xf32>
    %19 = arith.subf %11, %18 : vector<4x8x8xf32>
    %20 = math.exp %19 : vector<4x8x8xf32>
    %c0_19 = arith.constant 0 : index
    %c0_20 = arith.constant 0 : index
    %c0_21 = arith.constant 0 : index
    %21 = vector.load %arg9[%c0_19, %c0_20, %c0_21] : memref<4x8x1xf32, #tpu.memory_space<vmem>>, vector<4x8x1xf32>
    %22 = arith.mulf %17, %21 : vector<4x8x1xf32>
    %cst_22 = arith.constant dense<0.000000e+00> : vector<4x8xf32>
    %23 = vector.multi_reduction <add>, %20, %cst_22 [2] : vector<4x8x8xf32> to vector<4x8xf32>
    %24 = vector.shape_cast %23 : vector<4x8xf32> to vector<4x8x1xf32>
    %25 = arith.addf %22, %24 : vector<4x8x1xf32>
    %c0_23 = arith.constant 0 : index
    %c0_24 = arith.constant 0 : index
    %c0_25 = arith.constant 0 : index
    %26 = vector.load %arg9[%c0_23, %c0_24, %c0_25] : memref<4x8x1xf32, #tpu.memory_space<vmem>>, vector<4x8x1xf32>
    tpu.vector_store %arg9[%c0_23, %c0_24, %c0_25], %25 {strides = array<i32>} : memref<4x8x1xf32, #tpu.memory_space<vmem>>, vector<4x8x1xf32>,
    %c0_26 = arith.constant 0 : index
    %c0_27 = arith.constant 0 : index
    %c0_28 = arith.constant 0 : index
    %27 = vector.load %arg10[%c0_26, %c0_27, %c0_28] : memref<4x8x8xf32, #tpu.memory_space<vmem>>, vector<4x8x8xf32>
    %28 = vector.broadcast %17 : vector<4x8x1xf32> to vector<4x8x8xf32>
    %29 = arith.mulf %28, %27 : vector<4x8x8xf32>
    "tpu.trace_start"() <{level = 10 : i32, message = "hqk,hkd->hqd"}> : () -> ()
    %cst_29 = arith.constant dense<0.000000e+00> : vector<4x8x8xf32>
    %30 = tpu.matmul %20, %8, %cst_29 {dimension_numbers = #tpu.dot_dimension_numbers<[2], [1], [1], [2], [0, 0, 0, 1, 1, 2], [0], [0]>} : vector<4x8x8xf32>, vector<4x8x8xf32>, vector<4x8x8xf32> -> vector<4x8x8xf32>
    "tpu.trace_stop"() : () -> ()
    %31 = arith.addf %29, %30 : vector<4x8x8xf32>
    %c0_30 = arith.constant 0 : index
    %c0_31 = arith.constant 0 : index
    %c0_32 = arith.constant 0 : index
    %32 = vector.load %arg10[%c0_30, %c0_31, %c0_32] : memref<4x8x8xf32, #tpu.memory_space<vmem>>, vector<4x8x8xf32>
    tpu.vector_store %arg10[%c0_30, %c0_31, %c0_32], %31 {strides = array<i32>} : memref<4x8x8xf32, #tpu.memory_space<vmem>>, vector<4x8x8xf32>,
    %c0_33 = arith.constant 0 : index
    %c0_34 = arith.constant 0 : index
    %c0_35 = arith.constant 0 : index
    %33 = vector.load %arg8[%c0_33, %c0_34, %c0_35] : memref<4x8x1xf32, #tpu.memory_space<vmem>>, vector<4x8x1xf32>
    tpu.vector_store %arg8[%c0_33, %c0_34, %c0_35], %15 {strides = array<i32>} : memref<4x8x1xf32, #tpu.memory_space<vmem>>, vector<4x8x1xf32>,
    %c0_i32_36 = arith.constant 0 : i32
    %34 = arith.cmpi eq, %arg2, %c0_i32_36 : i32
    %35 = arith.extui %34 : i1 to i32
    %c0_i32_37 = arith.constant 0 : i32
    %36 = arith.cmpi ne, %35, %c0_i32_37 : i32
    scf.if %36 {
      %c0_38 = arith.constant 0 : index
      %c0_39 = arith.constant 0 : index
      %c0_40 = arith.constant 0 : index
      %37 = vector.load %arg9[%c0_38, %c0_39, %c0_40] : memref<4x8x1xf32, #tpu.memory_space<vmem>>, vector<4x8x1xf32>
      %38 = tpu.reciprocal %37 {approx = true} : vector<4x8x1xf32> -> vector<4x8x1xf32>
      %c0_41 = arith.constant 0 : index
      %c0_42 = arith.constant 0 : index
      %c0_43 = arith.constant 0 : index
      %39 = vector.load %arg10[%c0_41, %c0_42, %c0_43] : memref<4x8x8xf32, #tpu.memory_space<vmem>>, vector<4x8x8xf32>
      %40 = vector.broadcast %38 : vector<4x8x1xf32> to vector<4x8x8xf32>
      %41 = arith.mulf %39, %40 : vector<4x8x8xf32>
      %42 = vector.extract_strided_slice %41 {offsets = [0, 0, 0], sizes = [1, 8, 8], strides = [1, 1, 1]} : vector<4x8x8xf32> to vector<1x8x8xf32>
      %43 = vector.shape_cast %42 : vector<1x8x8xf32> to vector<8x8xf32>
      %c0_44 = arith.constant 0 : index
      %c0_45 = arith.constant 0 : index
      %c0_46 = arith.constant 0 : index
      %44 = vector.load %arg7[%c0_44, %c0_45, %c0_46] : memref<1x8x32xf32, #tpu.memory_space<vmem>>, vector<1x8x8xf32>
      %45 = vector.shape_cast %44 : vector<1x8x8xf32> to vector<8x8xf32>
      %46 = vector.shape_cast %43 : vector<8x8xf32> to vector<1x8x8xf32>
      tpu.vector_store %arg7[%c0_44, %c0_45, %c0_46], %46 {strides = array<i32>} : memref<1x8x32xf32, #tpu.memory_space<vmem>>, vector<1x8x8xf32>,
      %47 = vector.extract_strided_slice %41 {offsets = [1, 0, 0], sizes = [1, 8, 8], strides = [1, 1, 1]} : vector<4x8x8xf32> to vector<1x8x8xf32>
      %48 = vector.shape_cast %47 : vector<1x8x8xf32> to vector<8x8xf32>
      %c0_47 = arith.constant 0 : index
      %c0_48 = arith.constant 0 : index
      %c8 = arith.constant 8 : index
      %49 = vector.load %arg7[%c0_47, %c0_48, %c8] : memref<1x8x32xf32, #tpu.memory_space<vmem>>, vector<1x8x8xf32>
      %50 = vector.shape_cast %49 : vector<1x8x8xf32> to vector<8x8xf32>
      %51 = vector.shape_cast %48 : vector<8x8xf32> to vector<1x8x8xf32>
      tpu.vector_store %arg7[%c0_47, %c0_48, %c8], %51 {strides = array<i32>} : memref<1x8x32xf32, #tpu.memory_space<vmem>>, vector<1x8x8xf32>,
      %52 = vector.extract_strided_slice %41 {offsets = [2, 0, 0], sizes = [1, 8, 8], strides = [1, 1, 1]} : vector<4x8x8xf32> to vector<1x8x8xf32>
      %53 = vector.shape_cast %52 : vector<1x8x8xf32> to vector<8x8xf32>
      %c0_49 = arith.constant 0 : index
      %c0_50 = arith.constant 0 : index
      %c16 = arith.constant 16 : index
      %54 = vector.load %arg7[%c0_49, %c0_50, %c16] : memref<1x8x32xf32, #tpu.memory_space<vmem>>, vector<1x8x8xf32>
      %55 = vector.shape_cast %54 : vector<1x8x8xf32> to vector<8x8xf32>
      %56 = vector.shape_cast %53 : vector<8x8xf32> to vector<1x8x8xf32>
      tpu.vector_store %arg7[%c0_49, %c0_50, %c16], %56 {strides = array<i32>} : memref<1x8x32xf32, #tpu.memory_space<vmem>>, vector<1x8x8xf32>,
      %57 = vector.extract_strided_slice %41 {offsets = [3, 0, 0], sizes = [1, 8, 8], strides = [1, 1, 1]} : vector<4x8x8xf32> to vector<1x8x8xf32>
      %58 = vector.shape_cast %57 : vector<1x8x8xf32> to vector<8x8xf32>
      %c0_51 = arith.constant 0 : index
      %c0_52 = arith.constant 0 : index
      %c24 = arith.constant 24 : index
      %59 = vector.load %arg7[%c0_51, %c0_52, %c24] : memref<1x8x32xf32, #tpu.memory_space<vmem>>, vector<1x8x8xf32>
      %60 = vector.shape_cast %59 : vector<1x8x8xf32> to vector<8x8xf32>
      %61 = vector.shape_cast %58 : vector<8x8xf32> to vector<1x8x8xf32>
      tpu.vector_store %arg7[%c0_51, %c0_52, %c24], %61 {strides = array<i32>} : memref<1x8x32xf32, #tpu.memory_space<vmem>>, vector<1x8x8xf32>,
    } else {
    }
    return
  }
  func.func @transform_0(%arg0: i32, %arg1: i32, %arg2: i32) -> (i32, i32, i32, i32) {
    %c0_i32 = arith.constant 0 : i32
    %c0_i32_0 = arith.constant 0 : i32
    %c0_i32_1 = arith.constant 0 : i32
    return %arg0, %c0_i32, %arg1, %c0_i32_0 : i32, i32, i32, i32
  }
  func.func @transform_1(%arg0: i32, %arg1: i32, %arg2: i32) -> (i32, i32, i32, i32) {
    %c0_i32 = arith.constant 0 : i32
    %c0_i32_0 = arith.constant 0 : i32
    %c0_i32_1 = arith.constant 0 : i32
    return %arg0, %c0_i32, %c0_i32_0, %arg2 : i32, i32, i32, i32
  }
  func.func @transform_2(%arg0: i32, %arg1: i32, %arg2: i32) -> (i32, i32, i32, i32) {
    %c0_i32 = arith.constant 0 : i32
    %c0_i32_0 = arith.constant 0 : i32
    %c0_i32_1 = arith.constant 0 : i32
    return %arg0, %c0_i32, %arg2, %c0_i32_0 : i32, i32, i32, i32
  }
  func.func @transform_3(%arg0: i32, %arg1: i32, %arg2: i32) -> (i32, i32, i32) {
    %c0_i32 = arith.constant 0 : i32
    %c0_i32_0 = arith.constant 0 : i32
    return %c0_i32, %arg1, %arg2 : i32, i32, i32
  }
  func.func @transform_4(%arg0: i32, %arg1: i32, %arg2: i32) -> (i32, i32, i32) {
    %c0_i32 = arith.constant 0 : i32
    %c0_i32_0 = arith.constant 0 : i32
    return %arg0, %arg1, %c0_i32 : i32, i32, i32
  }
}

</mosaic_0001>

<llo_original>
// kernel: tpu_custom_call.1
$region0: #{tpu_custom_call.1}
  #allocation0 [shape = 'u32[]', space=smem, size = 0x4, offset = 0x4, fixed_abs, tag = 'smem constant byte address 0x4 - core index']
  #allocation1 [shape = 'u32[144,128]{1,0:T(1,128)}', space=vmem, size = 0x12000, scoped, tag = 'internal scratch']
  #allocation2 [shape = 'f32[4,8,1]{2,1,0:T(8,128)}', space=vmem, size = 0x4000, scoped, tag = 'scratch operand']
  #allocation3 [shape = 'f32[4,8,1]{2,1,0:T(8,128)}', space=vmem, size = 0x4000, scoped, tag = 'scratch operand']
  #allocation4 [shape = 'f32[4,8,8]{2,1,0:T(8,128)}', space=vmem, size = 0x4000, scoped, tag = 'scratch operand']
  %s0 = inlined_call_operand.hbm [shape: f32[2,4,8,8], index: 0, kind: input, shape index: {}]
  %s1 = inlined_call_operand.hbm [shape: f32[2,4,8,8], index: 1, kind: input, shape index: {}]
  %s2 = inlined_call_operand.hbm [shape: f32[2,4,8,8], index: 2, kind: input, shape index: {}]
  %s3 = inlined_call_operand.hbm [shape: f32[4,8,8], index: 3, kind: input, shape index: {}]
  %s4 = inlined_call_operand.hbm [shape: f32[2,8,32], index: 4, kind: output, shape index: {}]
  %s5 = sld [smem:[#allocation0]]
  $region73: #{tpu_custom_call.1} parent=0
    _
  %s7 = ssub.s32 1, %s5
  %s8 = scalar_select 0, %s7, %s5
  $region1: #{tpu_custom_call.1} parent=0
    #allocation5 [shape = 'u8[32768]{0}', space=vmem, size = 0x8000, scoped, tag = 'input window, operand 0']
    #allocation6 [shape = 's32[2]{0}', space=sflag, size = 0x8, scoped, tag = 'scoped memory for tpu_custom_call.1']
    #allocation7 [shape = 's32[2]{0}', space=sflag, size = 0x8, scoped, tag = 'scoped memory for tpu_custom_call.1']
    #allocation8 [shape = 'u8[32768]{0}', space=vmem, size = 0x8000, scoped, tag = 'input window, operand 1']
    #allocation9 [shape = 's32[2]{0}', space=sflag, size = 0x8, scoped, tag = 'scoped memory for tpu_custom_call.1']
    #allocation10 [shape = 'u8[32768]{0}', space=vmem, size = 0x8000, scoped, tag = 'input window, operand 2']
    #allocation11 [shape = 'u8[16384]{0}', space=vmem, size = 0x4000, scoped, tag = 'input window, operand 3, single buffered']
    #allocation12 [shape = 's32[1]{0}', space=sflag, size = 0x4, scoped, tag = 'scoped memory for tpu_custom_call.1']
    #allocation13 [shape = 'u8[8192]{0}', space=vmem, size = 0x2000, scoped, tag = 'output window, operand 0']
    %9 = vsyncpa [#allocation6], 0
    %s10 = scalar_lea.sflag [#allocation6], 1
    %11 = vsyncpa %s10, 0
    %12 = vsyncpa [#allocation9], 0
    %s13 = scalar_lea.sflag [#allocation9], 1
    %14 = vsyncpa %s13, 0
    %15 = vsyncpa [#allocation12], 0
    %16 = vsyncpa [#allocation7], 0
    %s17 = scalar_lea.sflag [#allocation7], 1
    %18 = vsyncpa %s17, 0
    loop: start=0, step=1, limit=4
    $region2: #{tpu_custom_call.1} parent=1 // loop_pre_header
      _
    $region3: #{tpu_custom_call.1} parent=1 // loop_header
      %s20 = sphi 0, %s24
      %p21 = scmp.ge.s32.totalorder %s20, 4
      %s27 = sphi 0, %s46
      %s28 = sphi 0, %s42
      %s29 = sphi 0, %s38
      %s30 = sphi 0, %s27
      %s31 = sphi 0, %s28
      %s32 = sphi 0, %s29
      %s33 = sphi 0, %s30
      %s34 = sphi 0, %s31
      %s35 = sphi 0, %s32
      %s51 = sphi 0, %s53
      %s54 = sphi 0, %s51
      %s55 = sphi 0, %s54
      %s71 = sphi 0, %s55
      %s79 = sphi 0, %s81
      %s82 = sphi 0, %s79
      %s83 = sphi 0, %s82
      %s99 = sphi 0, %s83
      %s107 = sphi 0, %s109
      %s110 = sphi 0, %s107
      %s111 = sphi 0, %s110
      %s127 = sphi 0, %s111
      %s135 = sphi 0, %s137
      %s138 = sphi 0, %s135
      %s139 = sphi 0, %s138
      %s155 = sphi 0, %s139
      %s163 = sphi 0, %s165
      %s166 = sphi 0, %s163
      %s167 = sphi 0, %s166
      %s183 = sphi 0, %s167
    $region4: #{tpu_custom_call.1} parent=1 // loop_header_branch
      %23 = sbr.rel (%p21) target = $region8
    $region5: #{tpu_custom_call.1} parent=1 // loop_body
      %s25 = ssub.s32 %s20, 1
      %s26 = ssub.s32 %s20, 2
      %s36 = sadd.s32 1, %s29
      %p37 = scmp.ge.s32.totalorder %s36, 1
      %s38 = scalar_select %p37, 0, %s36
      %s39 = sadd.s32 1, %s28
      %s40 = scalar_select %p37, %s39, %s28
      %p41 = scmp.ge.s32.totalorder %s40, 1
      %s42 = scalar_select %p41, 0, %s40
      %s43 = sadd.s32 1, %s27
      %s44 = scalar_select %p41, %s43, %s27
      %p45 = scmp.ge.s32.totalorder %s44, 2
      %s46 = scalar_select %p45, 0, %s44
      %s47 = ssub.s32 %s27, %s46
      %s48 = ssub.s32 %s28, %s42
      %s49 = sor.u32 %s47, %s48
      %p50 = scmp.eq.s32.totalorder %s49, 0
      %s52 = sadd.s32 %s51, 1
      %s53 = scalar_select %p50, %s51, %s52
      %p56 = pneg %p50
      %p57 = scmp.eq.s32.totalorder %s20, 1
      %p58 = por %p56, %p57
      %p59 = scmp.ne.s32.totalorder %s51, %s54
      %p60 = scmp.eq.s32.totalorder %s20, 0
      %p61 = por %p59, %p60
      %p62 = scmp.ne.s32.totalorder %s51, %s54
      %p63 = scmp.eq.s32.totalorder %s25, 1
      %p64 = por %p62, %p63
      %p65 = scmp.ne.s32.totalorder %s54, %s55
      %p66 = scmp.eq.s32.totalorder %s25, 0
      %p67 = por %p65, %p66
      %p68 = scmp.ne.s32.totalorder %s54, %s55
      %p69 = scmp.eq.s32.totalorder %s26, 1
      %p70 = por %p68, %p69
      %p72 = scmp.ne.s32.totalorder %s55, %s71
      %p73 = scmp.eq.s32.totalorder %s26, 0
      %p74 = por %p72, %p73
      %s75 = ssub.s32 %s27, %s46
      %s76 = ssub.s32 %s29, %s38
      %s77 = sor.u32 %s75, %s76
      %p78 = scmp.eq.s32.totalorder %s77, 0
      %s80 = sadd.s32 %s79, 1
      %s81 = scalar_select %p78, %s79, %s80
      %p84 = pneg %p78
      %p85 = scmp.eq.s32.totalorder %s20, 1
      %p86 = por %p84, %p85
      %p87 = scmp.ne.s32.totalorder %s79, %s82
      %p88 = scmp.eq.s32.totalorder %s20, 0
      %p89 = por %p87, %p88
      %p90 = scmp.ne.s32.totalorder %s79, %s82
      %p91 = scmp.eq.s32.totalorder %s25, 1
      %p92 = por %p90, %p91
      %p93 = scmp.ne.s32.totalorder %s82, %s83
      %p94 = scmp.eq.s32.totalorder %s25, 0
      %p95 = por %p93, %p94
      %p96 = scmp.ne.s32.totalorder %s82, %s83
      %p97 = scmp.eq.s32.totalorder %s26, 1
      %p98 = por %p96, %p97
      %p100 = scmp.ne.s32.totalorder %s83, %s99
      %p101 = scmp.eq.s32.totalorder %s26, 0
      %p102 = por %p100, %p101
      %s103 = ssub.s32 %s27, %s46
      %s104 = ssub.s32 %s29, %s38
      %s105 = sor.u32 %s103, %s104
      %p106 = scmp.eq.s32.totalorder %s105, 0
      %s108 = sadd.s32 %s107, 1
      %s109 = scalar_select %p106, %s107, %s108
      %p112 = pneg %p106
      %p113 = scmp.eq.s32.totalorder %s20, 1
      %p114 = por %p112, %p113
      %p115 = scmp.ne.s32.totalorder %s107, %s110
      %p116 = scmp.eq.s32.totalorder %s20, 0
      %p117 = por %p115, %p116
      %p118 = scmp.ne.s32.totalorder %s107, %s110
      %p119 = scmp.eq.s32.totalorder %s25, 1
      %p120 = por %p118, %p119
      %p121 = scmp.ne.s32.totalorder %s110, %s111
      %p122 = scmp.eq.s32.totalorder %s25, 0
      %p123 = por %p121, %p122
      %p124 = scmp.ne.s32.totalorder %s110, %s111
      %p125 = scmp.eq.s32.totalorder %s26, 1
      %p126 = por %p124, %p125
      %p128 = scmp.ne.s32.totalorder %s111, %s127
      %p129 = scmp.eq.s32.totalorder %s26, 0
      %p130 = por %p128, %p129
      %s131 = ssub.s32 %s28, %s42
      %s132 = ssub.s32 %s29, %s38
      %s133 = sor.u32 %s131, %s132
      %p134 = scmp.eq.s32.totalorder %s133, 0
      %s136 = sadd.s32 %s135, 1
      %s137 = scalar_select %p134, %s135, %s136
      %p140 = pneg %p134
      %p141 = scmp.eq.s32.totalorder %s20, 1
      %p142 = por %p140, %p141
      %p143 = scmp.ne.s32.totalorder %s135, %s138
      %p144 = scmp.eq.s32.totalorder %s20, 0
      %p145 = por %p143, %p144
      %p146 = scmp.ne.s32.totalorder %s135, %s138
      %p147 = scmp.eq.s32.totalorder %s25, 1
      %p148 = por %p146, %p147
      %p149 = scmp.ne.s32.totalorder %s138, %s139
      %p150 = scmp.eq.s32.totalorder %s25, 0
      %p151 = por %p149, %p150
      %p152 = scmp.ne.s32.totalorder %s138, %s139
      %p153 = scmp.eq.s32.totalorder %s26, 1
      %p154 = por %p152, %p153
      %p156 = scmp.ne.s32.totalorder %s139, %s155
      %p157 = scmp.eq.s32.totalorder %s26, 0
      %p158 = por %p156, %p157
      %s159 = ssub.s32 %s27, %s46
      %s160 = ssub.s32 %s28, %s42
      %s161 = sor.u32 %s159, %s160
      %p162 = scmp.eq.s32.totalorder %s161, 0
      %s164 = sadd.s32 %s163, 1
      %s165 = scalar_select %p162, %s163, %s164
      %p168 = pneg %p162
      %p169 = scmp.eq.s32.totalorder %s20, 1
      %p170 = por %p168, %p169
      %p171 = scmp.ne.s32.totalorder %s163, %s166
      %p172 = scmp.eq.s32.totalorder %s20, 0
      %p173 = por %p171, %p172
      %p174 = scmp.ne.s32.totalorder %s163, %s166
      %p175 = scmp.eq.s32.totalorder %s25, 1
      %p176 = por %p174, %p175
      %p177 = scmp.ne.s32.totalorder %s166, %s167
      %p178 = scmp.eq.s32.totalorder %s25, 0
      %p179 = por %p177, %p178
      %p180 = scmp.ne.s32.totalorder %s166, %s167
      %p181 = scmp.eq.s32.totalorder %s26, 1
      %p182 = por %p180, %p181
      %p184 = scmp.ne.s32.totalorder %s167, %s183
      %p185 = scmp.eq.s32.totalorder %s26, 0
      %p186 = por %p184, %p185
      %p187 = scmp.le.s32.totalorder 1, %s20
      %p188 = scmp.lt.s32.totalorder %s20, 3
      %p189 = pnand %p187, %p188
      %p190 = pneg %p189
      // Predicated region
      $region9: #{tpu_custom_call.1} parent=5 // pred_check
        _
      $region10: #{tpu_custom_call.1} parent=5 // pred_check_branch
        %192 = sbr.rel (%p189) target = $region12
      $region11: #{tpu_custom_call.1} parent=5 // pred_region
        %s193 = ssub.s32 %s20, 1
        // Predicated region
        $region13: #{tpu_custom_call.1} parent=11 // pred_check
          %p194 = pneg %p151
        $region14: #{tpu_custom_call.1} parent=11 // pred_check_branch
          %196 = sbr.rel (%p194) target = $region16
        $region15: #{tpu_custom_call.1} parent=11 // pred_region
          %s198 = ssub.s32 512, 512
          %199 = vsyncadd [#allocation12], %s198
          %s200 = sadd.s32 %s32, %s31
          %s201 = smul.addr %s200, 128
          %s202 = scalar_lea.hbm %s3, %s201
          %s203 = sshll.u32 [#allocation11], 4
          %s204 = int_to_ptr.vmem [resolvable:$true] %s203
          %209 = dma.hbm_to_vmem [thread:$0]  %s202, 512, %s204, [#allocation12], 128, 128, 8
        $region16: #{tpu_custom_call.1} parent=11 // pred_fallthru
          _
      $region12: #{tpu_custom_call.1} parent=5 // pred_fallthru
        _
      %p210 = scmp.lt.s32.totalorder %s20, 2
      // Predicated region
      $region17: #{tpu_custom_call.1} parent=5 // pred_check
        %p211 = pneg %p210
      $region18: #{tpu_custom_call.1} parent=5 // pred_check_branch
        %213 = sbr.rel (%p211) target = $region20
      $region19: #{tpu_custom_call.1} parent=5 // pred_region
        // Predicated region
        $region21: #{tpu_custom_call.1} parent=19 // pred_check
          %p214 = pneg %p61
        $region22: #{tpu_custom_call.1} parent=19 // pred_check_branch
          %216 = sbr.rel (%p214) target = $region24
        $region23: #{tpu_custom_call.1} parent=19 // pred_region
          %s217 = sand.u32 %s51, 1
          %s218 = scalar_lea.sflag [#allocation6], %s217
          %s219 = sand.u32 %s51, 1
          %s220 = smul.addr %s219, 32
          %s221 = scalar_lea.vmem [#allocation5], %s220
          %s223 = ssub.s32 512, 512
          %224 = vsyncadd %s218, %s223
          %s225 = smul.addr %s27, 4
          %s226 = sadd.s32 %s28, %s225
          %s227 = smul.addr %s226, 128
          %s228 = scalar_lea.hbm %s0, %s227
          %s229 = sshll.u32 %s221, 4
          %s230 = int_to_ptr.vmem [resolvable:$true] %s229
          %235 = dma.hbm_to_vmem [thread:$0]  %s228, 512, %s230, %s218, 128, 128, 8
        $region24: #{tpu_custom_call.1} parent=19 // pred_fallthru
          _
        // Predicated region
        $region25: #{tpu_custom_call.1} parent=19 // pred_check
          %p236 = pneg %p89
        $region26: #{tpu_custom_call.1} parent=19 // pred_check_branch
          %238 = sbr.rel (%p236) target = $region28
        $region27: #{tpu_custom_call.1} parent=19 // pred_region
          %s239 = sand.u32 %s20, 1
          %s240 = scalar_lea.sflag [#allocation9], %s239
          %s241 = sand.u32 %s79, 1
          %s242 = smul.addr %s241, 32
          %s243 = scalar_lea.vmem [#allocation8], %s242
          %s245 = ssub.s32 512, 512
          %246 = vsyncadd %s240, %s245
          %s247 = smul.addr %s27, 4
          %s248 = sadd.s32 %s29, %s247
          %s249 = smul.addr %s248, 128
          %s250 = scalar_lea.hbm %s1, %s249
          %s251 = sshll.u32 %s243, 4
          %s252 = int_to_ptr.vmem [resolvable:$true] %s251
          %257 = dma.hbm_to_vmem [thread:$0]  %s250, 512, %s252, %s240, 128, 128, 8
        $region28: #{tpu_custom_call.1} parent=19 // pred_fallthru
          _
        // Predicated region
        $region29: #{tpu_custom_call.1} parent=19 // pred_check
          %p258 = pneg %p117
        $region30: #{tpu_custom_call.1} parent=19 // pred_check_branch
          %260 = sbr.rel (%p258) target = $region32
        $region31: #{tpu_custom_call.1} parent=19 // pred_region
          %s261 = sand.u32 %s20, 1
          %s262 = scalar_lea.sflag [#allocation9], %s261
          %s263 = sand.u32 %s107, 1
          %s264 = smul.addr %s263, 32
          %s265 = scalar_lea.vmem [#allocation10], %s264
          %s267 = ssub.s32 512, 512
          %268 = vsyncadd %s262, %s267
          %s269 = smul.addr %s27, 4
          %s270 = sadd.s32 %s29, %s269
          %s271 = smul.addr %s270, 128
          %s272 = scalar_lea.hbm %s2, %s271
          %s273 = sshll.u32 %s265, 4
          %s274 = int_to_ptr.vmem [resolvable:$true] %s273
          %279 = dma.hbm_to_vmem [thread:$0]  %s272, 512, %s274, %s262, 128, 128, 8
        $region32: #{tpu_custom_call.1} parent=19 // pred_fallthru
          _
      $region20: #{tpu_custom_call.1} parent=5 // pred_fallthru
        _
      %p280 = scmp.le.s32.totalorder 1, %s20
      %p281 = scmp.lt.s32.totalorder %s20, 3
      %p282 = pnand %p280, %p281
      %p283 = pneg %p282
      // Predicated region
      $region33: #{tpu_custom_call.1} parent=5 // pred_check
        _
      $region34: #{tpu_custom_call.1} parent=5 // pred_check_branch
        %285 = sbr.rel (%p282) target = $region36
      $region35: #{tpu_custom_call.1} parent=5 // pred_region
        %s286 = ssub.s32 %s20, 1
        %s287 = sand.u32 %s54, 1
        %s288 = scalar_lea.sflag [#allocation6], %s287
        %s289 = sand.u32 %s54, 1
        %s290 = smul.addr %s289, 32
        %s291 = scalar_lea.vmem [#allocation5], %s290
        // Predicated region
        $region37: #{tpu_custom_call.1} parent=35 // pred_check
          %p292 = pneg %p67
        $region38: #{tpu_custom_call.1} parent=35 // pred_check_branch
          %294 = sbr.rel (%p292) target = $region40
        $region39: #{tpu_custom_call.1} parent=35 // pred_region
          %295 = dma.done %s288, 512
        $region40: #{tpu_custom_call.1} parent=35 // pred_fallthru
          _
        %s296 = sand.u32 %s25, 1
        %s297 = scalar_lea.sflag [#allocation9], %s296
        %s298 = sand.u32 %s82, 1
        %s299 = smul.addr %s298, 32
        %s300 = scalar_lea.vmem [#allocation8], %s299
        // Predicated region
        $region41: #{tpu_custom_call.1} parent=35 // pred_check
          %p301 = pneg %p95
        $region42: #{tpu_custom_call.1} parent=35 // pred_check_branch
          %303 = sbr.rel (%p301) target = $region44
        $region43: #{tpu_custom_call.1} parent=35 // pred_region
          %304 = dma.done %s297, 512
        $region44: #{tpu_custom_call.1} parent=35 // pred_fallthru
          _
        %s305 = sand.u32 %s25, 1
        %s306 = scalar_lea.sflag [#allocation9], %s305
        %s307 = sand.u32 %s110, 1
        %s308 = smul.addr %s307, 32
        %s309 = scalar_lea.vmem [#allocation10], %s308
        // Predicated region
        $region45: #{tpu_custom_call.1} parent=35 // pred_check
          %p310 = pneg %p123
        $region46: #{tpu_custom_call.1} parent=35 // pred_check_branch
          %312 = sbr.rel (%p310) target = $region48
        $region47: #{tpu_custom_call.1} parent=35 // pred_region
          %313 = dma.done %s306, 512
        $region48: #{tpu_custom_call.1} parent=35 // pred_fallthru
          _
        // Predicated region
        $region49: #{tpu_custom_call.1} parent=35 // pred_check
          %p314 = pneg %p151
        $region50: #{tpu_custom_call.1} parent=35 // pred_check_branch
          %316 = sbr.rel (%p314) target = $region52
        $region51: #{tpu_custom_call.1} parent=35 // pred_region
          %317 = dma.done [#allocation12], 512
        $region52: #{tpu_custom_call.1} parent=35 // pred_fallthru
          _
        %s318 = sand.u32 %s54, 1
        %s319 = scalar_lea.sflag [#allocation6], %s318
        %s320 = sand.u32 %s54, 1
        %s321 = smul.addr %s320, 32
        %s322 = scalar_lea.vmem [#allocation5], %s321
        %p323 = pneg %p67
        %p324 = pneg %p64
        %s325 = sand.u32 %s25, 1
        %s326 = scalar_lea.sflag [#allocation9], %s325
        %s327 = sand.u32 %s82, 1
        %s328 = smul.addr %s327, 32
        %s329 = scalar_lea.vmem [#allocation8], %s328
        %p330 = pneg %p95
        %p331 = pneg %p92
        %s332 = sand.u32 %s25, 1
        %s333 = scalar_lea.sflag [#allocation9], %s332
        %s334 = sand.u32 %s110, 1
        %s335 = smul.addr %s334, 32
        %s336 = scalar_lea.vmem [#allocation10], %s335
        %p337 = pneg %p123
        %p338 = pneg %p120
        %p339 = pneg %p151
        %p340 = pneg %p148
        %p341 = pneg %p179
        %p342 = pneg %p176
        %s343 = sand.u32 %s166, 1
        %s344 = scalar_lea.sflag [#allocation7], %s343
        %s345 = sand.u32 %s166, 1
        %s346 = smul.addr %s345, 8
        %s347 = scalar_lea.vmem [#allocation13], %s346
        %p348 = scmp.eq.s32.totalorder %s32, 0
        // Predicated region
        $region53: #{tpu_custom_call.1} parent=35 // pred_check
          %p349 = pneg %p348
        $region54: #{tpu_custom_call.1} parent=35 // pred_check_branch
          %351 = sbr.rel (%p349) target = $region56
        $region55: #{tpu_custom_call.1} parent=35 // pred_region
          %vm352 = vcmask 7168
          %353 = vst.msk [vmem:[#allocation2] sm:$0xff] %vm352, -inf
          %354 = vst.msk [vmem:[#allocation2 + $0x8] sm:$0xff] %vm352, -inf
          %355 = vst.msk [vmem:[#allocation2 + $0x10] sm:$0xff] %vm352, -inf
          %356 = vst.msk [vmem:[#allocation2 + $0x18] sm:$0xff] %vm352, -inf
          %357 = vst.msk [vmem:[#allocation3] sm:$0xff] %vm352, 0.0
          %358 = vst.msk [vmem:[#allocation3 + $0x8] sm:$0xff] %vm352, 0.0
          %359 = vst.msk [vmem:[#allocation3 + $0x10] sm:$0xff] %vm352, 0.0
          %360 = vst.msk [vmem:[#allocation3 + $0x18] sm:$0xff] %vm352, 0.0
          %vm361 = vcmask 64512
          %362 = vst.msk [vmem:[#allocation4] sm:$0xff] %vm361, 0.0
          %363 = vst.msk [vmem:[#allocation4 + $0x8] sm:$0xff] %vm361, 0.0
          %364 = vst.msk [vmem:[#allocation4 + $0x10] sm:$0xff] %vm361, 0.0
          %365 = vst.msk [vmem:[#allocation4 + $0x18] sm:$0xff] %vm361, 0.0
        $region56: #{tpu_custom_call.1} parent=35 // pred_fallthru
          _
        %v366 = vld [vmem:[%s291] sm:$0xff]
        %v367 = vld [vmem:[%s291 + $0x8] sm:$0xff]
        %v368 = vld [vmem:[%s291 + $0x10] sm:$0xff]
        %v369 = vld [vmem:[%s291 + $0x18] sm:$0xff]
        %v370 = vld [vmem:[%s300] sm:$0xff]
        %v371 = vld [vmem:[%s300 + $0x8] sm:$0xff]
        %v372 = vld [vmem:[%s300 + $0x10] sm:$0xff]
        %v373 = vld [vmem:[%s300 + $0x18] sm:$0xff]
        %v374 = vld [vmem:[%s309] sm:$0xff]
        %v375 = vld [vmem:[%s309 + $0x8] sm:$0xff]
        %v376 = vld [vmem:[%s309 + $0x10] sm:$0xff]
        %v377 = vld [vmem:[%s309 + $0x18] sm:$0xff]
        %v378 = vld [vmem:[#allocation11] sm:$0xff]
        %v379 = vld [vmem:[#allocation11 + $0x8] sm:$0xff]
        %v380 = vld [vmem:[#allocation11 + $0x10] sm:$0xff]
        %v381 = vld [vmem:[#allocation11 + $0x18] sm:$0xff]
        %vm382 = vcmask 64512
        %v384 = vsel %vm382, %v366, 0
        %386 = vmatprep.subr.mxu0 0.0
        %387 = vmatpush1.msra.mxu0 %v370
        %388 = vmatprep.subr.mxu0 0.0
        %389 = vmatpush1.msra.mxu0 0.0
        %390 = vmatprep.subr.mxu0 0.0
        %391 = vmatpush1.msra.mxu0 0.0
        %392 = vmatprep.subr.mxu0 0.0
        %393 = vmatpush1.msra.mxu0 0.0
        %394 = vmatprep.subr.mxu0 0.0
        %395 = vmatpush1.msra.mxu0 0.0
        %396 = vmatprep.subr.mxu0 0.0
        %397 = vmatpush1.msra.mxu0 0.0
        %398 = vmatprep.subr.mxu0 0.0
        %399 = vmatpush1.msra.mxu0 0.0
        %400 = vmatprep.subr.mxu0 0.0
        %401 = vmatpush1.msra.mxu0 0.0
        %402 = vmatprep.subr.mxu0 0.0
        %403 = vmatpush1.msra.mxu0 0.0
        %404 = vmatprep.subr.mxu0 0.0
        %405 = vmatpush1.msra.mxu0 0.0
        %406 = vmatprep.subr.mxu0 0.0
        %407 = vmatpush1.msra.mxu0 0.0
        %408 = vmatprep.subr.mxu0 0.0
        %409 = vmatpush1.msra.mxu0 0.0
        %410 = vmatprep.subr.mxu0 0.0
        %411 = vmatpush1.msra.mxu0 0.0
        %412 = vmatprep.subr.mxu0 0.0
        %413 = vmatpush1.msra.mxu0 0.0
        %414 = vmatprep.subr.mxu0 0.0
        %415 = vmatpush1.msra.mxu0 0.0
        %416 = vmatprep.subr.mxu0 0.0
        %417 = vmatpush1.msra.mxu0 0.0
        %418 = vmatprep.subr.mxu0 0.0
        %419 = vmatpush1.msra.mxu0 0.0
        %420 = vmatprep.subr.mxu0 0.0
        %421 = vmatpush1.msra.mxu0 0.0
        %422 = vmatprep.subr.mxu0 0.0
        %423 = vmatpush1.msra.mxu0 0.0
        %424 = vmatprep.subr.mxu0 0.0
        %425 = vmatpush1.msra.mxu0 0.0
        %426 = vmatprep.subr.mxu0 0.0
        %427 = vmatpush1.msra.mxu0 0.0
        %428 = vmatprep.subr.mxu0 0.0
        %429 = vmatpush1.msra.mxu0 0.0
        %430 = vmatprep.subr.mxu0 0.0
        %431 = vmatpush1.msra.mxu0 0.0
        %432 = vmatprep.subr.mxu0 0.0
        %433 = vmatpush1.msra.mxu0 0.0
        %434 = vmatprep.subr.mxu0 0.0
        %435 = vmatpush1.msra.mxu0 0.0
        %436 = vmatprep.subr.mxu0 0.0
        %437 = vmatpush1.msra.mxu0 0.0
        %438 = vmatprep.subr.mxu0 0.0
        %439 = vmatpush1.msra.mxu0 0.0
        %440 = vmatprep.subr.mxu0 0.0
        %441 = vmatpush1.msra.mxu0 0.0
        %442 = vmatprep.subr.mxu0 0.0
        %443 = vmatpush1.msra.mxu0 0.0
        %444 = vmatprep.subr.mxu0 0.0
        %445 = vmatpush1.msra.mxu0 0.0
        %446 = vmatprep.subr.mxu0 0.0
        %447 = vmatpush1.msra.mxu0 0.0
        %448 = vmatprep.subr.mxu0 0.0
        %449 = vmatpush1.msra.mxu0 0.0
        %450 = vmatprep.mubr.f32.mxu0 0.0
        %451 = vmatmul.mubr.f32.gmra.mrb[0].mxu0 %v384
        %v452 = vpop.f32.mrb[0].mxu0
        %v453 = vadd.f32 %v378, %v452
        %v454 = vpop.f32.mrb[0].mxu0
        %455 = vdwg.mxu0
        %v457 = vsel %vm382, %v367, 0
        %459 = vmatprep.subr.mxu0 0.0
        %460 = vmatpush1.msra.mxu0 %v371
        %461 = vmatprep.subr.mxu0 0.0
        %462 = vmatpush1.msra.mxu0 0.0
        %463 = vmatprep.subr.mxu0 0.0
        %464 = vmatpush1.msra.mxu0 0.0
        %465 = vmatprep.subr.mxu0 0.0
        %466 = vmatpush1.msra.mxu0 0.0
        %467 = vmatprep.subr.mxu0 0.0
        %468 = vmatpush1.msra.mxu0 0.0
        %469 = vmatprep.subr.mxu0 0.0
        %470 = vmatpush1.msra.mxu0 0.0
        %471 = vmatprep.subr.mxu0 0.0
        %472 = vmatpush1.msra.mxu0 0.0
        %473 = vmatprep.subr.mxu0 0.0
        %474 = vmatpush1.msra.mxu0 0.0
        %475 = vmatprep.subr.mxu0 0.0
        %476 = vmatpush1.msra.mxu0 0.0
        %477 = vmatprep.subr.mxu0 0.0
        %478 = vmatpush1.msra.mxu0 0.0
        %479 = vmatprep.subr.mxu0 0.0
        %480 = vmatpush1.msra.mxu0 0.0
        %481 = vmatprep.subr.mxu0 0.0
        %482 = vmatpush1.msra.mxu0 0.0
        %483 = vmatprep.subr.mxu0 0.0
        %484 = vmatpush1.msra.mxu0 0.0
        %485 = vmatprep.subr.mxu0 0.0
        %486 = vmatpush1.msra.mxu0 0.0
        %487 = vmatprep.subr.mxu0 0.0
        %488 = vmatpush1.msra.mxu0 0.0
        %489 = vmatprep.subr.mxu0 0.0
        %490 = vmatpush1.msra.mxu0 0.0
        %491 = vmatprep.subr.mxu0 0.0
        %492 = vmatpush1.msra.mxu0 0.0
        %493 = vmatprep.subr.mxu0 0.0
        %494 = vmatpush1.msra.mxu0 0.0
        %495 = vmatprep.subr.mxu0 0.0
        %496 = vmatpush1.msra.mxu0 0.0
        %497 = vmatprep.subr.mxu0 0.0
        %498 = vmatpush1.msra.mxu0 0.0
        %499 = vmatprep.subr.mxu0 0.0
        %500 = vmatpush1.msra.mxu0 0.0
        %501 = vmatprep.subr.mxu0 0.0
        %502 = vmatpush1.msra.mxu0 0.0
        %503 = vmatprep.subr.mxu0 0.0
        %504 = vmatpush1.msra.mxu0 0.0
        %505 = vmatprep.subr.mxu0 0.0
        %506 = vmatpush1.msra.mxu0 0.0
        %507 = vmatprep.subr.mxu0 0.0
        %508 = vmatpush1.msra.mxu0 0.0
        %509 = vmatprep.subr.mxu0 0.0
        %510 = vmatpush1.msra.mxu0 0.0
        %511 = vmatprep.subr.mxu0 0.0
        %512 = vmatpush1.msra.mxu0 0.0
        %513 = vmatprep.subr.mxu0 0.0
        %514 = vmatpush1.msra.mxu0 0.0
        %515 = vmatprep.subr.mxu0 0.0
        %516 = vmatpush1.msra.mxu0 0.0
        %517 = vmatprep.subr.mxu0 0.0
        %518 = vmatpush1.msra.mxu0 0.0
        %519 = vmatprep.subr.mxu0 0.0
        %520 = vmatpush1.msra.mxu0 0.0
        %521 = vmatprep.subr.mxu0 0.0
        %522 = vmatpush1.msra.mxu0 0.0
        %523 = vmatprep.mubr.f32.mxu0 0.0
        %524 = vmatmul.mubr.f32.gmra.mrb[0].mxu0 %v457
        %v525 = vpop.f32.mrb[0].mxu0
        %v526 = vadd.f32 %v379, %v525
        %v527 = vpop.f32.mrb[0].mxu0
        %528 = vdwg.mxu0
        %v530 = vsel %vm382, %v368, 0
        %532 = vmatprep.subr.mxu0 0.0
        %533 = vmatpush1.msra.mxu0 %v372
        %534 = vmatprep.subr.mxu0 0.0
        %535 = vmatpush1.msra.mxu0 0.0
        %536 = vmatprep.subr.mxu0 0.0
        %537 = vmatpush1.msra.mxu0 0.0
        %538 = vmatprep.subr.mxu0 0.0
        %539 = vmatpush1.msra.mxu0 0.0
        %540 = vmatprep.subr.mxu0 0.0
        %541 = vmatpush1.msra.mxu0 0.0
        %542 = vmatprep.subr.mxu0 0.0
        %543 = vmatpush1.msra.mxu0 0.0
        %544 = vmatprep.subr.mxu0 0.0
        %545 = vmatpush1.msra.mxu0 0.0
        %546 = vmatprep.subr.mxu0 0.0
        %547 = vmatpush1.msra.mxu0 0.0
        %548 = vmatprep.subr.mxu0 0.0
        %549 = vmatpush1.msra.mxu0 0.0
        %550 = vmatprep.subr.mxu0 0.0
        %551 = vmatpush1.msra.mxu0 0.0
        %552 = vmatprep.subr.mxu0 0.0
        %553 = vmatpush1.msra.mxu0 0.0
        %554 = vmatprep.subr.mxu0 0.0
        %555 = vmatpush1.msra.mxu0 0.0
        %556 = vmatprep.subr.mxu0 0.0
        %557 = vmatpush1.msra.mxu0 0.0
        %558 = vmatprep.subr.mxu0 0.0
        %559 = vmatpush1.msra.mxu0 0.0
        %560 = vmatprep.subr.mxu0 0.0
        %561 = vmatpush1.msra.mxu0 0.0
        %562 = vmatprep.subr.mxu0 0.0
        %563 = vmatpush1.msra.mxu0 0.0
        %564 = vmatprep.subr.mxu0 0.0
        %565 = vmatpush1.msra.mxu0 0.0
        %566 = vmatprep.subr.mxu0 0.0
        %567 = vmatpush1.msra.mxu0 0.0
        %568 = vmatprep.subr.mxu0 0.0
        %569 = vmatpush1.msra.mxu0 0.0
        %570 = vmatprep.subr.mxu0 0.0
        %571 = vmatpush1.msra.mxu0 0.0
        %572 = vmatprep.subr.mxu0 0.0
        %573 = vmatpush1.msra.mxu0 0.0
        %574 = vmatprep.subr.mxu0 0.0
        %575 = vmatpush1.msra.mxu0 0.0
        %576 = vmatprep.subr.mxu0 0.0
        %577 = vmatpush1.msra.mxu0 0.0
        %578 = vmatprep.subr.mxu0 0.0
        %579 = vmatpush1.msra.mxu0 0.0
        %580 = vmatprep.subr.mxu0 0.0
        %581 = vmatpush1.msra.mxu0 0.0
        %582 = vmatprep.subr.mxu0 0.0
        %583 = vmatpush1.msra.mxu0 0.0
        %584 = vmatprep.subr.mxu0 0.0
        %585 = vmatpush1.msra.mxu0 0.0
        %586 = vmatprep.subr.mxu0 0.0
        %587 = vmatpush1.msra.mxu0 0.0
        %588 = vmatprep.subr.mxu0 0.0
        %589 = vmatpush1.msra.mxu0 0.0
        %590 = vmatprep.subr.mxu0 0.0
        %591 = vmatpush1.msra.mxu0 0.0
        %592 = vmatprep.subr.mxu0 0.0
        %593 = vmatpush1.msra.mxu0 0.0
        %594 = vmatprep.subr.mxu0 0.0
        %595 = vmatpush1.msra.mxu0 0.0
        %596 = vmatprep.mubr.f32.mxu0 0.0
        %597 = vmatmul.mubr.f32.gmra.mrb[0].mxu0 %v530
        %v598 = vpop.f32.mrb[0].mxu0
        %v599 = vadd.f32 %v380, %v598
        %v600 = vpop.f32.mrb[0].mxu0
        %601 = vdwg.mxu0
        %v603 = vsel %vm382, %v369, 0
        %605 = vmatprep.subr.mxu0 0.0
        %606 = vmatpush1.msra.mxu0 %v373
        %607 = vmatprep.subr.mxu0 0.0
        %608 = vmatpush1.msra.mxu0 0.0
        %609 = vmatprep.subr.mxu0 0.0
        %610 = vmatpush1.msra.mxu0 0.0
        %611 = vmatprep.subr.mxu0 0.0
        %612 = vmatpush1.msra.mxu0 0.0
        %613 = vmatprep.subr.mxu0 0.0
        %614 = vmatpush1.msra.mxu0 0.0
        %615 = vmatprep.subr.mxu0 0.0
        %616 = vmatpush1.msra.mxu0 0.0
        %617 = vmatprep.subr.mxu0 0.0
        %618 = vmatpush1.msra.mxu0 0.0
        %619 = vmatprep.subr.mxu0 0.0
        %620 = vmatpush1.msra.mxu0 0.0
        %621 = vmatprep.subr.mxu0 0.0
        %622 = vmatpush1.msra.mxu0 0.0
        %623 = vmatprep.subr.mxu0 0.0
        %624 = vmatpush1.msra.mxu0 0.0
        %625 = vmatprep.subr.mxu0 0.0
        %626 = vmatpush1.msra.mxu0 0.0
        %627 = vmatprep.subr.mxu0 0.0
        %628 = vmatpush1.msra.mxu0 0.0
        %629 = vmatprep.subr.mxu0 0.0
        %630 = vmatpush1.msra.mxu0 0.0
        %631 = vmatprep.subr.mxu0 0.0
        %632 = vmatpush1.msra.mxu0 0.0
        %633 = vmatprep.subr.mxu0 0.0
        %634 = vmatpush1.msra.mxu0 0.0
        %635 = vmatprep.subr.mxu0 0.0
        %636 = vmatpush1.msra.mxu0 0.0
        %637 = vmatprep.subr.mxu0 0.0
        %638 = vmatpush1.msra.mxu0 0.0
        %639 = vmatprep.subr.mxu0 0.0
        %640 = vmatpush1.msra.mxu0 0.0
        %641 = vmatprep.subr.mxu0 0.0
        %642 = vmatpush1.msra.mxu0 0.0
        %643 = vmatprep.subr.mxu0 0.0
        %644 = vmatpush1.msra.mxu0 0.0
        %645 = vmatprep.subr.mxu0 0.0
        %646 = vmatpush1.msra.mxu0 0.0
        %647 = vmatprep.subr.mxu0 0.0
        %648 = vmatpush1.msra.mxu0 0.0
        %649 = vmatprep.subr.mxu0 0.0
        %650 = vmatpush1.msra.mxu0 0.0
        %651 = vmatprep.subr.mxu0 0.0
        %652 = vmatpush1.msra.mxu0 0.0
        %653 = vmatprep.subr.mxu0 0.0
        %654 = vmatpush1.msra.mxu0 0.0
        %655 = vmatprep.subr.mxu0 0.0
        %656 = vmatpush1.msra.mxu0 0.0
        %657 = vmatprep.subr.mxu0 0.0
        %658 = vmatpush1.msra.mxu0 0.0
        %659 = vmatprep.subr.mxu0 0.0
        %660 = vmatpush1.msra.mxu0 0.0
        %661 = vmatprep.subr.mxu0 0.0
        %662 = vmatpush1.msra.mxu0 0.0
        %663 = vmatprep.subr.mxu0 0.0
        %664 = vmatpush1.msra.mxu0 0.0
        %665 = vmatprep.subr.mxu0 0.0
        %666 = vmatpush1.msra.mxu0 0.0
        %667 = vmatprep.subr.mxu0 0.0
        %668 = vmatpush1.msra.mxu0 0.0
        %669 = vmatprep.mubr.f32.mxu0 0.0
        %670 = vmatmul.mubr.f32.gmra.mrb[0].mxu0 %v603
        %v671 = vpop.f32.mrb[0].mxu0
        %v672 = vadd.f32 %v381, %v671
        %v673 = vpop.f32.mrb[0].mxu0
        %674 = vdwg.mxu0
        %v675 = vld [vmem:[#allocation2] sm:$0xff]
        %v676 = vld [vmem:[#allocation2 + $0x8] sm:$0xff]
        %v677 = vld [vmem:[#allocation2 + $0x10] sm:$0xff]
        %v678 = vld [vmem:[#allocation2 + $0x18] sm:$0xff]
        %v679 = vsel %vm382, %v453, -inf
        %680 = vmax.xlane.f32.xlu0 %v679
        %v681 = vpop.xlane.xlu0 %680
        %v682 = vsel %vm382, %v526, -inf
        %683 = vmax.xlane.f32.xlu0 %v682
        %v684 = vpop.xlane.xlu0 %683
        %v685 = vsel %vm382, %v599, -inf
        %686 = vmax.xlane.f32.xlu0 %v685
        %v687 = vpop.xlane.xlu0 %686
        %v688 = vsel %vm382, %v672, -inf
        %689 = vmax.xlane.f32.xlu0 %v688
        %v690 = vpop.xlane.xlu0 %689
        %v691 = vmax.f32 %v675, %v681
        %v692 = vmax.f32 %v676, %v684
        %v693 = vmax.f32 %v677, %v687
        %v694 = vmax.f32 %v678, %v690
        %v695 = vsub.f32 %v675, %v691
        %v696 = vsub.f32 %v676, %v692
        %v697 = vsub.f32 %v677, %v693
        %v698 = vsub.f32 %v678, %v694
        %v699 = vmul.f32 %v695, 1.442695
        %v700 = vpow.pop %v699
        %v701 = vmul.f32 %v696, 1.442695
        %v702 = vpow.pop %v701
        %v703 = vmul.f32 %v697, 1.442695
        %v704 = vpow.pop %v703
        %v705 = vmul.f32 %v698, 1.442695
        %v706 = vpow.pop %v705
        %708 = vset.pattern.permute.xlu0 0
        %709 = vperm.xlu0 %708, %v691
        %v710 = vpop.permute.xlu0 %709
        %713 = vset.pattern.permute.xlu0 0
        %714 = vperm.xlu0 %713, %v692
        %v715 = vpop.permute.xlu0 %714
        %718 = vset.pattern.permute.xlu0 0
        %719 = vperm.xlu0 %718, %v693
        %v720 = vpop.permute.xlu0 %719
        %723 = vset.pattern.permute.xlu0 0
        %724 = vperm.xlu0 %723, %v694
        %v725 = vpop.permute.xlu0 %724
        %v727 = vsub.f32 %v453, %v710
        %v728 = vsub.f32 %v526, %v715
        %v729 = vsub.f32 %v599, %v720
        %v730 = vsub.f32 %v672, %v725
        %v731 = vmul.f32 %v727, 1.442695
        %v732 = vpow.pop %v731
        %v733 = vmul.f32 %v728, 1.442695
        %v734 = vpow.pop %v733
        %v735 = vmul.f32 %v729, 1.442695
        %v736 = vpow.pop %v735
        %v737 = vmul.f32 %v730, 1.442695
        %v738 = vpow.pop %v737
        %v739 = vld [vmem:[#allocation3] sm:$0xff]
        %v740 = vld [vmem:[#allocation3 + $0x8] sm:$0xff]
        %v741 = vld [vmem:[#allocation3 + $0x10] sm:$0xff]
        %v742 = vld [vmem:[#allocation3 + $0x18] sm:$0xff]
        %v743 = vmul.f32 %v700, %v739
        %v744 = vmul.f32 %v702, %v740
        %v745 = vmul.f32 %v704, %v741
        %v746 = vmul.f32 %v706, %v742
        %v747 = vsel %vm382, %v732, 0.0
        %748 = vadd.xlane.f32.xlu0 %v747
        %v749 = vpop.xlane.xlu0 %748
        %v750 = vsel %vm382, %v734, 0.0
        %751 = vadd.xlane.f32.xlu0 %v750
        %v752 = vpop.xlane.xlu0 %751
        %v753 = vsel %vm382, %v736, 0.0
        %754 = vadd.xlane.f32.xlu0 %v753
        %v755 = vpop.xlane.xlu0 %754
        %v756 = vsel %vm382, %v738, 0.0
        %757 = vadd.xlane.f32.xlu0 %v756
        %v758 = vpop.xlane.xlu0 %757
        %v759 = vadd.f32 %v743, %v749
        %v760 = vadd.f32 %v744, %v752
        %v761 = vadd.f32 %v745, %v755
        %v762 = vadd.f32 %v746, %v758
        %vm763 = vcmask 7168
        %764 = vst.msk [vmem:[#allocation3] sm:$0xff] %vm763, %v759
        %765 = vst.msk [vmem:[#allocation3 + $0x8] sm:$0xff] %vm763, %v760
        %766 = vst.msk [vmem:[#allocation3 + $0x10] sm:$0xff] %vm763, %v761
        %767 = vst.msk [vmem:[#allocation3 + $0x18] sm:$0xff] %vm763, %v762
        %v768 = vld [vmem:[#allocation4] sm:$0xff]
        %v769 = vld [vmem:[#allocation4 + $0x8] sm:$0xff]
        %v770 = vld [vmem:[#allocation4 + $0x10] sm:$0xff]
        %v771 = vld [vmem:[#allocation4 + $0x18] sm:$0xff]
        %773 = vset.pattern.permute.xlu0 0
        %774 = vperm.xlu0 %773, %v700
        %v775 = vpop.permute.xlu0 %774
        %778 = vset.pattern.permute.xlu0 0
        %779 = vperm.xlu0 %778, %v702
        %v780 = vpop.permute.xlu0 %779
        %783 = vset.pattern.permute.xlu0 0
        %784 = vperm.xlu0 %783, %v704
        %v785 = vpop.permute.xlu0 %784
        %788 = vset.pattern.permute.xlu0 0
        %789 = vperm.xlu0 %788, %v706
        %v790 = vpop.permute.xlu0 %789
        %v792 = vmul.f32 %v775, %v768
        %v793 = vmul.f32 %v780, %v769
        %v794 = vmul.f32 %v785, %v770
        %v795 = vmul.f32 %v790, %v771
        %v797 = vsel %vm382, %v732, 0
        %799 = vmatprep.subr.mxu0 0.0
        %800 = vmatpush1.msra.mxu0 %v374
        %801 = vmatprep.subr.mxu0 0.0
        %802 = vmatpush1.msra.mxu0 0.0
        %803 = vmatprep.subr.mxu0 0.0
        %804 = vmatpush1.msra.mxu0 0.0
        %805 = vmatprep.subr.mxu0 0.0
        %806 = vmatpush1.msra.mxu0 0.0
        %807 = vmatprep.subr.mxu0 0.0
        %808 = vmatpush1.msra.mxu0 0.0
        %809 = vmatprep.subr.mxu0 0.0
        %810 = vmatpush1.msra.mxu0 0.0
        %811 = vmatprep.subr.mxu0 0.0
        %812 = vmatpush1.msra.mxu0 0.0
        %813 = vmatprep.subr.mxu0 0.0
        %814 = vmatpush1.msra.mxu0 0.0
        %815 = vmatprep.subr.mxu0 0.0
        %816 = vmatpush1.msra.mxu0 0.0
        %817 = vmatprep.subr.mxu0 0.0
        %818 = vmatpush1.msra.mxu0 0.0
        %819 = vmatprep.subr.mxu0 0.0
        %820 = vmatpush1.msra.mxu0 0.0
        %821 = vmatprep.subr.mxu0 0.0
        %822 = vmatpush1.msra.mxu0 0.0
        %823 = vmatprep.subr.mxu0 0.0
        %824 = vmatpush1.msra.mxu0 0.0
        %825 = vmatprep.subr.mxu0 0.0
        %826 = vmatpush1.msra.mxu0 0.0
        %827 = vmatprep.subr.mxu0 0.0
        %828 = vmatpush1.msra.mxu0 0.0
        %829 = vmatprep.subr.mxu0 0.0
        %830 = vmatpush1.msra.mxu0 0.0
        %831 = vmatprep.subr.mxu0 0.0
        %832 = vmatpush1.msra.mxu0 0.0
        %833 = vmatprep.subr.mxu0 0.0
        %834 = vmatpush1.msra.mxu0 0.0
        %835 = vmatprep.subr.mxu0 0.0
        %836 = vmatpush1.msra.mxu0 0.0
        %837 = vmatprep.subr.mxu0 0.0
        %838 = vmatpush1.msra.mxu0 0.0
        %839 = vmatprep.subr.mxu0 0.0
        %840 = vmatpush1.msra.mxu0 0.0
        %841 = vmatprep.subr.mxu0 0.0
        %842 = vmatpush1.msra.mxu0 0.0
        %843 = vmatprep.subr.mxu0 0.0
        %844 = vmatpush1.msra.mxu0 0.0
        %845 = vmatprep.subr.mxu0 0.0
        %846 = vmatpush1.msra.mxu0 0.0
        %847 = vmatprep.subr.mxu0 0.0
        %848 = vmatpush1.msra.mxu0 0.0
        %849 = vmatprep.subr.mxu0 0.0
        %850 = vmatpush1.msra.mxu0 0.0
        %851 = vmatprep.subr.mxu0 0.0
        %852 = vmatpush1.msra.mxu0 0.0
        %853 = vmatprep.subr.mxu0 0.0
        %854 = vmatpush1.msra.mxu0 0.0
        %855 = vmatprep.subr.mxu0 0.0
        %856 = vmatpush1.msra.mxu0 0.0
        %857 = vmatprep.subr.mxu0 0.0
        %858 = vmatpush1.msra.mxu0 0.0
        %859 = vmatprep.subr.mxu0 0.0
        %860 = vmatpush1.msra.mxu0 0.0
        %861 = vmatprep.subr.mxu0 0.0
        %862 = vmatpush1.msra.mxu0 0.0
        %863 = vmatprep.mubr.f32.mxu0 0.0
        %864 = vmatmul.mubr.f32.gmra.mrb[0].mxu0 %v797
        %v865 = vpop.f32.mrb[0].mxu0
        %v866 = vadd.f32 0.0, %v865
        %v867 = vpop.f32.mrb[0].mxu0
        %868 = vdwg.mxu0
        %v870 = vsel %vm382, %v734, 0
        %872 = vmatprep.subr.mxu0 0.0
        %873 = vmatpush1.msra.mxu0 %v375
        %874 = vmatprep.subr.mxu0 0.0
        %875 = vmatpush1.msra.mxu0 0.0
        %876 = vmatprep.subr.mxu0 0.0
        %877 = vmatpush1.msra.mxu0 0.0
        %878 = vmatprep.subr.mxu0 0.0
        %879 = vmatpush1.msra.mxu0 0.0
        %880 = vmatprep.subr.mxu0 0.0
        %881 = vmatpush1.msra.mxu0 0.0
        %882 = vmatprep.subr.mxu0 0.0
        %883 = vmatpush1.msra.mxu0 0.0
        %884 = vmatprep.subr.mxu0 0.0
        %885 = vmatpush1.msra.mxu0 0.0
        %886 = vmatprep.subr.mxu0 0.0
        %887 = vmatpush1.msra.mxu0 0.0
        %888 = vmatprep.subr.mxu0 0.0
        %889 = vmatpush1.msra.mxu0 0.0
        %890 = vmatprep.subr.mxu0 0.0
        %891 = vmatpush1.msra.mxu0 0.0
        %892 = vmatprep.subr.mxu0 0.0
        %893 = vmatpush1.msra.mxu0 0.0
        %894 = vmatprep.subr.mxu0 0.0
        %895 = vmatpush1.msra.mxu0 0.0
        %896 = vmatprep.subr.mxu0 0.0
        %897 = vmatpush1.msra.mxu0 0.0
        %898 = vmatprep.subr.mxu0 0.0
        %899 = vmatpush1.msra.mxu0 0.0
        %900 = vmatprep.subr.mxu0 0.0
        %901 = vmatpush1.msra.mxu0 0.0
        %902 = vmatprep.subr.mxu0 0.0
        %903 = vmatpush1.msra.mxu0 0.0
        %904 = vmatprep.subr.mxu0 0.0
        %905 = vmatpush1.msra.mxu0 0.0
        %906 = vmatprep.subr.mxu0 0.0
        %907 = vmatpush1.msra.mxu0 0.0
        %908 = vmatprep.subr.mxu0 0.0
        %909 = vmatpush1.msra.mxu0 0.0
        %910 = vmatprep.subr.mxu0 0.0
        %911 = vmatpush1.msra.mxu0 0.0
        %912 = vmatprep.subr.mxu0 0.0
        %913 = vmatpush1.msra.mxu0 0.0
        %914 = vmatprep.subr.mxu0 0.0
        %915 = vmatpush1.msra.mxu0 0.0
        %916 = vmatprep.subr.mxu0 0.0
        %917 = vmatpush1.msra.mxu0 0.0
        %918 = vmatprep.subr.mxu0 0.0
        %919 = vmatpush1.msra.mxu0 0.0
        %920 = vmatprep.subr.mxu0 0.0
        %921 = vmatpush1.msra.mxu0 0.0
        %922 = vmatprep.subr.mxu0 0.0
        %923 = vmatpush1.msra.mxu0 0.0
        %924 = vmatprep.subr.mxu0 0.0
        %925 = vmatpush1.msra.mxu0 0.0
        %926 = vmatprep.subr.mxu0 0.0
        %927 = vmatpush1.msra.mxu0 0.0
        %928 = vmatprep.subr.mxu0 0.0
        %929 = vmatpush1.msra.mxu0 0.0
        %930 = vmatprep.subr.mxu0 0.0
        %931 = vmatpush1.msra.mxu0 0.0
        %932 = vmatprep.subr.mxu0 0.0
        %933 = vmatpush1.msra.mxu0 0.0
        %934 = vmatprep.subr.mxu0 0.0
        %935 = vmatpush1.msra.mxu0 0.0
        %936 = vmatprep.mubr.f32.mxu0 0.0
        %937 = vmatmul.mubr.f32.gmra.mrb[0].mxu0 %v870
        %v938 = vpop.f32.mrb[0].mxu0
        %v939 = vadd.f32 0.0, %v938
        %v940 = vpop.f32.mrb[0].mxu0
        %941 = vdwg.mxu0
        %v943 = vsel %vm382, %v736, 0
        %945 = vmatprep.subr.mxu0 0.0
        %946 = vmatpush1.msra.mxu0 %v376
        %947 = vmatprep.subr.mxu0 0.0
        %948 = vmatpush1.msra.mxu0 0.0
        %949 = vmatprep.subr.mxu0 0.0
        %950 = vmatpush1.msra.mxu0 0.0
        %951 = vmatprep.subr.mxu0 0.0
        %952 = vmatpush1.msra.mxu0 0.0
        %953 = vmatprep.subr.mxu0 0.0
        %954 = vmatpush1.msra.mxu0 0.0
        %955 = vmatprep.subr.mxu0 0.0
        %956 = vmatpush1.msra.mxu0 0.0
        %957 = vmatprep.subr.mxu0 0.0
        %958 = vmatpush1.msra.mxu0 0.0
        %959 = vmatprep.subr.mxu0 0.0
        %960 = vmatpush1.msra.mxu0 0.0
        %961 = vmatprep.subr.mxu0 0.0
        %962 = vmatpush1.msra.mxu0 0.0
        %963 = vmatprep.subr.mxu0 0.0
        %964 = vmatpush1.msra.mxu0 0.0
        %965 = vmatprep.subr.mxu0 0.0
        %966 = vmatpush1.msra.mxu0 0.0
        %967 = vmatprep.subr.mxu0 0.0
        %968 = vmatpush1.msra.mxu0 0.0
        %969 = vmatprep.subr.mxu0 0.0
        %970 = vmatpush1.msra.mxu0 0.0
        %971 = vmatprep.subr.mxu0 0.0
        %972 = vmatpush1.msra.mxu0 0.0
        %973 = vmatprep.subr.mxu0 0.0
        %974 = vmatpush1.msra.mxu0 0.0
        %975 = vmatprep.subr.mxu0 0.0
        %976 = vmatpush1.msra.mxu0 0.0
        %977 = vmatprep.subr.mxu0 0.0
        %978 = vmatpush1.msra.mxu0 0.0
        %979 = vmatprep.subr.mxu0 0.0
        %980 = vmatpush1.msra.mxu0 0.0
        %981 = vmatprep.subr.mxu0 0.0
        %982 = vmatpush1.msra.mxu0 0.0
        %983 = vmatprep.subr.mxu0 0.0
        %984 = vmatpush1.msra.mxu0 0.0
        %985 = vmatprep.subr.mxu0 0.0
        %986 = vmatpush1.msra.mxu0 0.0
        %987 = vmatprep.subr.mxu0 0.0
        %988 = vmatpush1.msra.mxu0 0.0
        %989 = vmatprep.subr.mxu0 0.0
        %990 = vmatpush1.msra.mxu0 0.0
        %991 = vmatprep.subr.mxu0 0.0
        %992 = vmatpush1.msra.mxu0 0.0
        %993 = vmatprep.subr.mxu0 0.0
        %994 = vmatpush1.msra.mxu0 0.0
        %995 = vmatprep.subr.mxu0 0.0
        %996 = vmatpush1.msra.mxu0 0.0
        %997 = vmatprep.subr.mxu0 0.0
        %998 = vmatpush1.msra.mxu0 0.0
        %999 = vmatprep.subr.mxu0 0.0
        %1000 = vmatpush1.msra.mxu0 0.0
        %1001 = vmatprep.subr.mxu0 0.0
        %1002 = vmatpush1.msra.mxu0 0.0
        %1003 = vmatprep.subr.mxu0 0.0
        %1004 = vmatpush1.msra.mxu0 0.0
        %1005 = vmatprep.subr.mxu0 0.0
        %1006 = vmatpush1.msra.mxu0 0.0
        %1007 = vmatprep.subr.mxu0 0.0
        %1008 = vmatpush1.msra.mxu0 0.0
        %1009 = vmatprep.mubr.f32.mxu0 0.0
        %1010 = vmatmul.mubr.f32.gmra.mrb[0].mxu0 %v943
        %v1011 = vpop.f32.mrb[0].mxu0
        %v1012 = vadd.f32 0.0, %v1011
        %v1013 = vpop.f32.mrb[0].mxu0
        %1014 = vdwg.mxu0
        %v1016 = vsel %vm382, %v738, 0
        %1018 = vmatprep.subr.mxu0 0.0
        %1019 = vmatpush1.msra.mxu0 %v377
        %1020 = vmatprep.subr.mxu0 0.0
        %1021 = vmatpush1.msra.mxu0 0.0
        %1022 = vmatprep.subr.mxu0 0.0
        %1023 = vmatpush1.msra.mxu0 0.0
        %1024 = vmatprep.subr.mxu0 0.0
        %1025 = vmatpush1.msra.mxu0 0.0
        %1026 = vmatprep.subr.mxu0 0.0
        %1027 = vmatpush1.msra.mxu0 0.0
        %1028 = vmatprep.subr.mxu0 0.0
        %1029 = vmatpush1.msra.mxu0 0.0
        %1030 = vmatprep.subr.mxu0 0.0
        %1031 = vmatpush1.msra.mxu0 0.0
        %1032 = vmatprep.subr.mxu0 0.0
        %1033 = vmatpush1.msra.mxu0 0.0
        %1034 = vmatprep.subr.mxu0 0.0
        %1035 = vmatpush1.msra.mxu0 0.0
        %1036 = vmatprep.subr.mxu0 0.0
        %1037 = vmatpush1.msra.mxu0 0.0
        %1038 = vmatprep.subr.mxu0 0.0
        %1039 = vmatpush1.msra.mxu0 0.0
        %1040 = vmatprep.subr.mxu0 0.0
        %1041 = vmatpush1.msra.mxu0 0.0
        %1042 = vmatprep.subr.mxu0 0.0
        %1043 = vmatpush1.msra.mxu0 0.0
        %1044 = vmatprep.subr.mxu0 0.0
        %1045 = vmatpush1.msra.mxu0 0.0
        %1046 = vmatprep.subr.mxu0 0.0
        %1047 = vmatpush1.msra.mxu0 0.0
        %1048 = vmatprep.subr.mxu0 0.0
        %1049 = vmatpush1.msra.mxu0 0.0
        %1050 = vmatprep.subr.mxu0 0.0
        %1051 = vmatpush1.msra.mxu0 0.0
        %1052 = vmatprep.subr.mxu0 0.0
        %1053 = vmatpush1.msra.mxu0 0.0
        %1054 = vmatprep.subr.mxu0 0.0
        %1055 = vmatpush1.msra.mxu0 0.0
        %1056 = vmatprep.subr.mxu0 0.0
        %1057 = vmatpush1.msra.mxu0 0.0
        %1058 = vmatprep.subr.mxu0 0.0
        %1059 = vmatpush1.msra.mxu0 0.0
        %1060 = vmatprep.subr.mxu0 0.0
        %1061 = vmatpush1.msra.mxu0 0.0
        %1062 = vmatprep.subr.mxu0 0.0
        %1063 = vmatpush1.msra.mxu0 0.0
        %1064 = vmatprep.subr.mxu0 0.0
        %1065 = vmatpush1.msra.mxu0 0.0
        %1066 = vmatprep.subr.mxu0 0.0
        %1067 = vmatpush1.msra.mxu0 0.0
        %1068 = vmatprep.subr.mxu0 0.0
        %1069 = vmatpush1.msra.mxu0 0.0
        %1070 = vmatprep.subr.mxu0 0.0
        %1071 = vmatpush1.msra.mxu0 0.0
        %1072 = vmatprep.subr.mxu0 0.0
        %1073 = vmatpush1.msra.mxu0 0.0
        %1074 = vmatprep.subr.mxu0 0.0
        %1075 = vmatpush1.msra.mxu0 0.0
        %1076 = vmatprep.subr.mxu0 0.0
        %1077 = vmatpush1.msra.mxu0 0.0
        %1078 = vmatprep.subr.mxu0 0.0
        %1079 = vmatpush1.msra.mxu0 0.0
        %1080 = vmatprep.subr.mxu0 0.0
        %1081 = vmatpush1.msra.mxu0 0.0
        %1082 = vmatprep.mubr.f32.mxu0 0.0
        %1083 = vmatmul.mubr.f32.gmra.mrb[0].mxu0 %v1016
        %v1084 = vpop.f32.mrb[0].mxu0
        %v1085 = vadd.f32 0.0, %v1084
        %v1086 = vpop.f32.mrb[0].mxu0
        %1087 = vdwg.mxu0
        %v1088 = vadd.f32 %v792, %v866
        %v1089 = vadd.f32 %v793, %v939
        %v1090 = vadd.f32 %v794, %v1012
        %v1091 = vadd.f32 %v795, %v1085
        %1092 = vst.msk [vmem:[#allocation4] sm:$0xff] %vm382, %v1088
        %1093 = vst.msk [vmem:[#allocation4 + $0x8] sm:$0xff] %vm382, %v1089
        %1094 = vst.msk [vmem:[#allocation4 + $0x10] sm:$0xff] %vm382, %v1090
        %1095 = vst.msk [vmem:[#allocation4 + $0x18] sm:$0xff] %vm382, %v1091
        %1096 = vst.msk [vmem:[#allocation2] sm:$0xff] %vm763, %v691
        %1097 = vst.msk [vmem:[#allocation2 + $0x8] sm:$0xff] %vm763, %v692
        %1098 = vst.msk [vmem:[#allocation2 + $0x10] sm:$0xff] %vm763, %v693
        %1099 = vst.msk [vmem:[#allocation2 + $0x18] sm:$0xff] %vm763, %v694
        // Predicated region
        $region57: #{tpu_custom_call.1} parent=35 // pred_check
          %p1100 = pneg %p348
        $region58: #{tpu_custom_call.1} parent=35 // pred_check_branch
          %1102 = sbr.rel (%p1100) target = $region60
        $region59: #{tpu_custom_call.1} parent=35 // pred_region
          %v1103 = vld [vmem:[#allocation3] sm:$0xff]
          %v1104 = vld [vmem:[#allocation3 + $0x8] sm:$0xff]
          %v1105 = vld [vmem:[#allocation3 + $0x10] sm:$0xff]
          %v1106 = vld [vmem:[#allocation3 + $0x18] sm:$0xff]
          %v1107 = vrcp.pop %v1103
          %v1108 = vrcp.pop %v1104
          %v1109 = vrcp.pop %v1105
          %v1110 = vrcp.pop %v1106
          %v1111 = vld [vmem:[#allocation4] sm:$0xff]
          %v1112 = vld [vmem:[#allocation4 + $0x8] sm:$0xff]
          %v1113 = vld [vmem:[#allocation4 + $0x10] sm:$0xff]
          %v1114 = vld [vmem:[#allocation4 + $0x18] sm:$0xff]
          %1116 = vset.pattern.permute.xlu0 0
          %1117 = vperm.xlu0 %1116, %v1107
          %v1118 = vpop.permute.xlu0 %1117
          %1121 = vset.pattern.permute.xlu0 0
          %1122 = vperm.xlu0 %1121, %v1108
          %v1123 = vpop.permute.xlu0 %1122
          %1126 = vset.pattern.permute.xlu0 0
          %1127 = vperm.xlu0 %1126, %v1109
          %v1128 = vpop.permute.xlu0 %1127
          %1131 = vset.pattern.permute.xlu0 0
          %1132 = vperm.xlu0 %1131, %v1110
          %v1133 = vpop.permute.xlu0 %1132
          %v1135 = vmul.f32 %v1111, %v1118
          %v1136 = vmul.f32 %v1112, %v1123
          %v1137 = vmul.f32 %v1113, %v1128
          %v1138 = vmul.f32 %v1114, %v1133
          %1139 = vst.msk [vmem:[%s347] sm:$0xff] %vm382, %v1135
          %1141 = vrot.lane.b32.xlu0 %v1136, 8
          %v1142 = vpop.permute.xlu0 %1141
          %vm1144 = vcmask 130112
          %1145 = vst.msk [vmem:[%s347] sm:$0xff] %vm1144, %v1142
          %1147 = vrot.lane.b32.xlu0 %v1137, 16
          %v1148 = vpop.permute.xlu0 %1147
          %vm1150 = vcmask 195712
          %1151 = vst.msk [vmem:[%s347] sm:$0xff] %vm1150, %v1148
          %1153 = vrot.lane.b32.xlu0 %v1138, 24
          %v1154 = vpop.permute.xlu0 %1153
          %vm1156 = vcmask 261312
          %1157 = vst.msk [vmem:[%s347] sm:$0xff] %vm1156, %v1154
        $region60: #{tpu_custom_call.1} parent=35 // pred_fallthru
          _
        %s1158 = sand.u32 %s166, 1
        %s1159 = scalar_lea.sflag [#allocation7], %s1158
        %s1160 = sand.u32 %s166, 1
        %s1161 = smul.addr %s1160, 8
        %s1162 = scalar_lea.vmem [#allocation13], %s1161
        // Predicated region
        $region61: #{tpu_custom_call.1} parent=35 // pred_check
          %p1163 = pneg %p176
        $region62: #{tpu_custom_call.1} parent=35 // pred_check_branch
          %1165 = sbr.rel (%p1163) target = $region64
        $region63: #{tpu_custom_call.1} parent=35 // pred_region
          %s1167 = ssub.s32 128, 128
          %1168 = vsyncadd %s1159, %s1167
          %s1169 = sadd.s32 %s31, %s30
          %s1170 = smul.addr %s1169, 128
          %s1171 = scalar_lea.hbm %s4, %s1170
          %s1173 = sshll.u32 %s1162, 4
          %s1174 = int_to_ptr.vmem [resolvable:$true] %s1173
          %1176 = dma.vmem_to_hbm [thread:$0]  %s1174, 128, %s1171, %s1159
        $region64: #{tpu_custom_call.1} parent=35 // pred_fallthru
          _
      $region36: #{tpu_custom_call.1} parent=5 // pred_fallthru
        _
      %p1177 = scmp.le.s32.totalorder 2, %s20
      // Predicated region
      $region65: #{tpu_custom_call.1} parent=5 // pred_check
        %p1178 = pneg %p1177
      $region66: #{tpu_custom_call.1} parent=5 // pred_check_branch
        %1180 = sbr.rel (%p1178) target = $region68
      $region67: #{tpu_custom_call.1} parent=5 // pred_region
        %s1181 = ssub.s32 %s20, 2
        // Predicated region
        $region69: #{tpu_custom_call.1} parent=67 // pred_check
          %p1182 = pneg %p182
        $region70: #{tpu_custom_call.1} parent=67 // pred_check_branch
          %1184 = sbr.rel (%p1182) target = $region72
        $region71: #{tpu_custom_call.1} parent=67 // pred_region
          %s1185 = sand.u32 %s167, 1
          %s1186 = scalar_lea.sflag [#allocation7], %s1185
          %s1187 = sand.u32 %s167, 1
          %s1188 = smul.addr %s1187, 8
          %s1189 = scalar_lea.vmem [#allocation13], %s1188
          %1190 = dma.done %s1186, 128
        $region72: #{tpu_custom_call.1} parent=67 // pred_fallthru
          _
      $region68: #{tpu_custom_call.1} parent=5 // pred_fallthru
        _
    $region6: #{tpu_custom_call.1} parent=1 // loop_footer
      %s24 = sadd.s32 1, %s20
    $region7: #{tpu_custom_call.1} parent=1 // loop_footer_branch
      %19 = sbr.rel target = $region3
    $region8: #{tpu_custom_call.1} parent=1 // loop_exit
      _
    %1191 = vsyncpa [#allocation6], 1
    %s1192 = scalar_lea.sflag [#allocation6], 1
    %1193 = vsyncpa %s1192, 1
    %1194 = vsyncpa [#allocation9], 1
    %s1195 = scalar_lea.sflag [#allocation9], 1
    %1196 = vsyncpa %s1195, 1
    %1197 = vsyncpa [#allocation12], 1
    %1198 = vsyncpa [#allocation7], 1
    %s1199 = scalar_lea.sflag [#allocation7], 1
    %1200 = vsyncpa %s1199, 1

</llo_original>
